<compile_context>
chip_gen: v7x
topology: tpu7x:2x2x1
jax: 0.10.0
libtpu: 0.0.40
codegen_flags: <defaults>
</compile_context>

<pallas_src>
import functools

import jax
import jax.numpy as jnp
from jax.experimental import pallas as pl
from jax.experimental.pallas import tpu as pltpu

# logical dims (from the PyTorch module)
WVF_IN = 90
ACG_IN = 1 * 10 * 101          # 1010
REP_DIM = 200                  # encoder dim_rep
LATENT = 10                    # latent_dim
TEMPERATURE = 0.5
LN_EPS = 1e-5

# padded (lane / MXU friendly) dims
WVF_PAD = 128
ACG_PAD = 1024
REP_PAD = 256

N = 64                         # batch


def _ln_l2(z, gamma, beta):
    """LayerNorm(latent) -> L2 normalize (module uses plain x / x.norm, no eps)."""
    mu = jnp.mean(z, axis=-1, keepdims=True)
    var = jnp.mean((z - mu) * (z - mu), axis=-1, keepdims=True)
    z = (z - mu) * jax.lax.rsqrt(var + LN_EPS) * gamma + beta
    return z * jax.lax.rsqrt(jnp.sum(z * z, axis=-1, keepdims=True))


def bimodal_kernel(
    wfs_ref,      # (N, WVF_PAD)  bf16
    acg_ref,      # (N, ACG_PAD)  bf16
    w_wvf_ref,    # (WVF_PAD, REP_PAD) bf16
    w_acg_ref,    # (ACG_PAD, REP_PAD) bf16
    wp_ref,       # (REP_PAD, 2*LATENT) bf16   fused [wp_wvf | wp_acg]
    sp_ref,       # (8, REP_PAD) f32  packed small params
    out_ref,      # (1, 1) f32 in SMEM
    *, inv_temp, latent,
):
    # packed small params:
    #   row 0: b_wvf          (REP_DIM cols, rest 0)
    #   row 1: b_acg
    #   row 2: [bp_wvf | bp_acg]        (2*latent cols)
    #   row 3: [ln_gamma_wvf | ln_gamma_acg]
    #   row 4: [ln_beta_wvf  | ln_beta_acg]
    b_wvf = sp_ref[0:1, :]
    b_acg = sp_ref[1:2, :]
    bp = sp_ref[2:3, 0:2 * latent]

    # --- encoders (placeholder Linear + GELU, see TODO above) ---
    # bf16 MXU operands, f32 accumulation / elementwise.
    h_w = jnp.dot(wfs_ref[...], w_wvf_ref[...],
                  preferred_element_type=jnp.float32) + b_wvf
    h_a = jnp.dot(acg_ref[...], w_acg_ref[...],
                  preferred_element_type=jnp.float32) + b_acg

    # TODO(synk): PyTorch nn.GELU() is the exact erf form; tanh approx used here.
    h_w = jax.nn.gelu(h_w, approximate=True).astype(jnp.bfloat16)
    h_a = jax.nn.gelu(h_a, approximate=True).astype(jnp.bfloat16)

    # --- projectors: register-resident activations against fused weight ---
    z_w = jnp.dot(h_w, wp_ref[...], preferred_element_type=jnp.float32) + bp
    z_a = jnp.dot(h_a, wp_ref[...], preferred_element_type=jnp.float32) + bp
    z_w = z_w[:, 0:latent]                  # h_w @ wp_wvf block
    z_a = z_a[:, latent:2 * latent]         # h_a @ wp_acg block

    x = _ln_l2(z_w, sp_ref[3:4, 0:latent], sp_ref[4:5, 0:latent])
    y = _ln_l2(z_a, sp_ref[3:4, latent:2 * latent], sp_ref[4:5, latent:2 * latent])

    # --- BiModalContractiveLoss over the whole batch (in registers) ---
    # xsim = X @ Y^T / temperature
    xsim = jax.lax.dot_general(
        x, y, (((1,), (1,)), ((), ())),
        preferred_element_type=jnp.float32) * inv_temp
    # diag(xsim) == sum(x*y, -1)/t ; identical for row and column views.
    diag = jnp.sum(x * y, axis=-1, keepdims=True) * inv_temp      # (N, 1)

    m_r = jnp.max(xsim, axis=1, keepdims=True)
    lse_r = m_r + jnp.log(jnp.sum(jnp.exp(xsim - m_r), axis=1, keepdims=True))
    m_c = jnp.max(xsim, axis=0, keepdims=True)
    lse_c = m_c + jnp.log(jnp.sum(jnp.exp(xsim - m_c), axis=0, keepdims=True))

    # 0.5*(CE(xsim, arange) + CE(xsim^T, arange))
    loss = 0.5 * (jnp.mean(lse_r) + jnp.mean(lse_c)) - jnp.mean(diag)
    out_ref[0, 0] = loss


def init_params(key):
    """Parameters at the module's logical shapes."""
    ks = jax.random.split(key, 8)

    def lin(kw, kb, fan_in, fan_out):
        bound = 1.0 / jnp.sqrt(fan_in)
        w = jax.random.uniform(kw, (fan_in, fan_out), jnp.float32, -bound, bound)
        b = jax.random.uniform(kb, (1, fan_out), jnp.float32, -bound, bound)
        return w, b

    p = {}
    p["w_wvf"], p["b_wvf"] = lin(ks[0], ks[1], WVF_IN, REP_DIM)
    p["w_acg"], p["b_acg"] = lin(ks[2], ks[3], ACG_IN, REP_DIM)
    p["wp_wvf"], p["bp_wvf"] = lin(ks[4], ks[5], REP_DIM, LATENT)
    p["wp_acg"], p["bp_acg"] = lin(ks[6], ks[7], REP_DIM, LATENT)
    p["g_wvf"] = jnp.ones((1, LATENT), jnp.float32)
    p["be_wvf"] = jnp.zeros((1, LATENT), jnp.float32)
    p["g_acg"] = jnp.ones((1, LATENT), jnp.float32)
    p["be_acg"] = jnp.zeros((1, LATENT), jnp.float32)
    return p


def _pad2(a, rows, cols):
    return jnp.pad(a, ((0, rows - a.shape[0]), (0, cols - a.shape[1])))


def prepare_params(p):
    """Zero-pad to aligned shapes, fuse projector params, cast MXU operands to
    bf16, and pack all small f32 params into a single (8, REP_PAD) block."""
    w_wvf = _pad2(p["w_wvf"], WVF_PAD, REP_PAD).astype(jnp.bfloat16)
    w_acg = _pad2(p["w_acg"], ACG_PAD, REP_PAD).astype(jnp.bfloat16)
    wp = jnp.concatenate(
        [_pad2(p["wp_wvf"], REP_PAD, LATENT), _pad2(p["wp_acg"], REP_PAD, LATENT)],
        axis=1).astype(jnp.bfloat16)                             # (REP_PAD, 2*LATENT)

    sp = jnp.zeros((8, REP_PAD), jnp.float32)
    sp = sp.at[0, :REP_DIM].set(p["b_wvf"][0])
    sp = sp.at[1, :REP_DIM].set(p["b_acg"][0])
    sp = sp.at[2, :LATENT].set(p["bp_wvf"][0])
    sp = sp.at[2, LATENT:2 * LATENT].set(p["bp_acg"][0])
    sp = sp.at[3, :LATENT].set(p["g_wvf"][0])
    sp = sp.at[3, LATENT:2 * LATENT].set(p["g_acg"][0])
    sp = sp.at[4, :LATENT].set(p["be_wvf"][0])
    sp = sp.at[4, LATENT:2 * LATENT].set(p["be_acg"][0])
    return dict(w_wvf=w_wvf, w_acg=w_acg, wp=wp, sp=sp)


def prepare_inputs(wfs, acg):
    """Pre-bake padded bf16 activations at data-prep time (no extra XLA pass
    inside the jitted forward)."""
    n = wfs.shape[0]
    wfs_p = jnp.pad(wfs.astype(jnp.float32),
                    ((0, 0), (0, WVF_PAD - WVF_IN))).astype(jnp.bfloat16)
    acg_p = jnp.pad(acg.reshape(n, -1).astype(jnp.float32),
                    ((0, 0), (0, ACG_PAD - ACG_IN))).astype(jnp.bfloat16)
    return wfs_p, acg_p


@jax.jit
def bimodal_forward(wfs_p, acg_p, prep):
    kernel = functools.partial(
        bimodal_kernel, inv_temp=1.0 / TEMPERATURE, latent=LATENT)

    out = pl.pallas_call(
        kernel,
        out_shape=jax.ShapeDtypeStruct((1, 1), jnp.float32),
        # single invocation: every operand is one full-array VMEM block,
        # weights + activations + intermediates are well under 1 MiB.
        in_specs=[pl.BlockSpec(memory_space=pltpu.MemorySpace.VMEM)] * 6,
        out_specs=pl.BlockSpec(memory_space=pltpu.MemorySpace.SMEM),
    )(wfs_p, acg_p, prep["w_wvf"], prep["w_acg"], prep["wp"], prep["sp"])
    return out[0, 0]


if __name__ == "__main__":
    key = jax.random.PRNGKey(0)
    k_wfs, k_acg, k_p = jax.random.split(key, 3)

    wfs = jax.random.normal(k_wfs, (N, WVF_IN), jnp.float32)
    acg = jax.random.normal(k_acg, (N, 1, 10, 101), jnp.float32)

    params = init_params(k_p)
    prep = prepare_params(params)
    wfs_p, acg_p = prepare_inputs(wfs, acg)

    loss = bimodal_forward(wfs_p, acg_p, prep)
    jax.block_until_ready(loss)
    assert jnp.isfinite(loss), "loss is not finite"
    print("KERNEL_OK")
</pallas_src>

<mosaic_0001>
module attributes {stable_mosaic.version = 11 : i64} {
  func.func @bimodal_kernel(%arg0: memref<64x128xbf16, #tpu.memory_space<vmem>>, %arg1: memref<64x1024xbf16, #tpu.memory_space<vmem>>, %arg2: memref<128x256xbf16, #tpu.memory_space<vmem>>, %arg3: memref<1024x256xbf16, #tpu.memory_space<vmem>>, %arg4: memref<256x20xbf16, #tpu.memory_space<vmem>>, %arg5: memref<8x256xf32, #tpu.memory_space<vmem>>, %arg6: memref<1x1xf32, #tpu.memory_space<smem>>) attributes {dimension_semantics = [], scalar_prefetch = 0 : i64, scratch_operands = 0 : i64, tpu.core_type = #tpu.core_type<tc>} {
    %c0 = arith.constant 0 : index
    %c0_0 = arith.constant 0 : index
    %0 = vector.load %arg5[%c0, %c0_0] : memref<8x256xf32, #tpu.memory_space<vmem>>, vector<1x256xf32>
    %c1 = arith.constant 1 : index
    %c0_1 = arith.constant 0 : index
    %1 = vector.load %arg5[%c1, %c0_1] : memref<8x256xf32, #tpu.memory_space<vmem>>, vector<1x256xf32>
    %c2 = arith.constant 2 : index
    %c0_2 = arith.constant 0 : index
    %2 = vector.load %arg5[%c2, %c0_2] : memref<8x256xf32, #tpu.memory_space<vmem>>, vector<1x20xf32>
    %c0_3 = arith.constant 0 : index
    %c0_4 = arith.constant 0 : index
    %3 = vector.load %arg0[%c0_3, %c0_4] : memref<64x128xbf16, #tpu.memory_space<vmem>>, vector<64x128xbf16>
    %c0_5 = arith.constant 0 : index
    %c0_6 = arith.constant 0 : index
    %4 = vector.load %arg2[%c0_5, %c0_6] : memref<128x256xbf16, #tpu.memory_space<vmem>>, vector<128x256xbf16>
    %cst = arith.constant dense<0.000000e+00> : vector<64x256xf32>
    %5 = tpu.matmul %3, %4, %cst {dimension_numbers = #tpu.dot_dimension_numbers<[1], [0], [0], [1], [0, 0, 1, 1], [], []>} : vector<64x128xbf16>, vector<128x256xbf16>, vector<64x256xf32> -> vector<64x256xf32>
    %6 = vector.broadcast %0 : vector<1x256xf32> to vector<64x256xf32>
    %7 = arith.addf %5, %6 : vector<64x256xf32>
    %c0_7 = arith.constant 0 : index
    %c0_8 = arith.constant 0 : index
    %8 = vector.load %arg1[%c0_7, %c0_8] : memref<64x1024xbf16, #tpu.memory_space<vmem>>, vector<64x1024xbf16>
    %c0_9 = arith.constant 0 : index
    %c0_10 = arith.constant 0 : index
    %9 = vector.load %arg3[%c0_9, %c0_10] : memref<1024x256xbf16, #tpu.memory_space<vmem>>, vector<1024x256xbf16>
    %cst_11 = arith.constant dense<0.000000e+00> : vector<64x256xf32>
    %10 = tpu.matmul %8, %9, %cst_11 {dimension_numbers = #tpu.dot_dimension_numbers<[1], [0], [0], [1], [0, 0, 1, 1], [], []>} : vector<64x1024xbf16>, vector<1024x256xbf16>, vector<64x256xf32> -> vector<64x256xf32>
    %11 = vector.broadcast %1 : vector<1x256xf32> to vector<64x256xf32>
    %12 = arith.addf %10, %11 : vector<64x256xf32>
    %13 = arith.mulf %7, %7 : vector<64x256xf32>
    %14 = arith.mulf %7, %13 : vector<64x256xf32>
    %cst_12 = arith.constant 4.471500e-02 : f32
    %15 = vector.broadcast %cst_12 : f32 to vector<64x256xf32>
    %16 = arith.mulf %15, %14 : vector<64x256xf32>
    %17 = arith.addf %7, %16 : vector<64x256xf32>
    %cst_13 = arith.constant 0.797884583 : f32
    %18 = vector.broadcast %cst_13 : f32 to vector<64x256xf32>
    %19 = arith.mulf %18, %17 : vector<64x256xf32>
    %20 = math.tanh %19 : vector<64x256xf32>
    %cst_14 = arith.constant 1.000000e+00 : f32
    %21 = vector.broadcast %cst_14 : f32 to vector<64x256xf32>
    %22 = arith.addf %21, %20 : vector<64x256xf32>
    %cst_15 = arith.constant 5.000000e-01 : f32
    %23 = vector.broadcast %cst_15 : f32 to vector<64x256xf32>
    %24 = arith.mulf %23, %22 : vector<64x256xf32>
    %25 = arith.mulf %7, %24 : vector<64x256xf32>
    %26 = arith.truncf %25 : vector<64x256xf32> to vector<64x256xbf16>
    %27 = arith.mulf %12, %12 : vector<64x256xf32>
    %28 = arith.mulf %12, %27 : vector<64x256xf32>
    %cst_16 = arith.constant 4.471500e-02 : f32
    %29 = vector.broadcast %cst_16 : f32 to vector<64x256xf32>
    %30 = arith.mulf %29, %28 : vector<64x256xf32>
    %31 = arith.addf %12, %30 : vector<64x256xf32>
    %cst_17 = arith.constant 0.797884583 : f32
    %32 = vector.broadcast %cst_17 : f32 to vector<64x256xf32>
    %33 = arith.mulf %32, %31 : vector<64x256xf32>
    %34 = math.tanh %33 : vector<64x256xf32>
    %cst_18 = arith.constant 1.000000e+00 : f32
    %35 = vector.broadcast %cst_18 : f32 to vector<64x256xf32>
    %36 = arith.addf %35, %34 : vector<64x256xf32>
    %cst_19 = arith.constant 5.000000e-01 : f32
    %37 = vector.broadcast %cst_19 : f32 to vector<64x256xf32>
    %38 = arith.mulf %37, %36 : vector<64x256xf32>
    %39 = arith.mulf %12, %38 : vector<64x256xf32>
    %40 = arith.truncf %39 : vector<64x256xf32> to vector<64x256xbf16>
    %c0_20 = arith.constant 0 : index
    %c0_21 = arith.constant 0 : index
    %41 = vector.load %arg4[%c0_20, %c0_21] : memref<256x20xbf16, #tpu.memory_space<vmem>>, vector<256x20xbf16>
    %cst_22 = arith.constant dense<0.000000e+00> : vector<64x20xf32>
    %42 = tpu.matmul %26, %41, %cst_22 {dimension_numbers = #tpu.dot_dimension_numbers<[1], [0], [0], [1], [0, 0, 1, 1], [], []>} : vector<64x256xbf16>, vector<256x20xbf16>, vector<64x20xf32> -> vector<64x20xf32>
    %43 = vector.broadcast %2 : vector<1x20xf32> to vector<64x20xf32>
    %44 = arith.addf %42, %43 : vector<64x20xf32>
    %c0_23 = arith.constant 0 : index
    %c0_24 = arith.constant 0 : index
    %45 = vector.load %arg4[%c0_23, %c0_24] : memref<256x20xbf16, #tpu.memory_space<vmem>>, vector<256x20xbf16>
    %cst_25 = arith.constant dense<0.000000e+00> : vector<64x20xf32>
    %46 = tpu.matmul %40, %45, %cst_25 {dimension_numbers = #tpu.dot_dimension_numbers<[1], [0], [0], [1], [0, 0, 1, 1], [], []>} : vector<64x256xbf16>, vector<256x20xbf16>, vector<64x20xf32> -> vector<64x20xf32>
    %47 = vector.broadcast %2 : vector<1x20xf32> to vector<64x20xf32>
    %48 = arith.addf %46, %47 : vector<64x20xf32>
    %49 = vector.extract_strided_slice %44 {offsets = [0, 0], sizes = [64, 10], strides = [1, 1]} : vector<64x20xf32> to vector<64x10xf32>
    %50 = vector.extract_strided_slice %48 {offsets = [0, 10], sizes = [64, 10], strides = [1, 1]} : vector<64x20xf32> to vector<64x10xf32>
    %c3 = arith.constant 3 : index
    %c0_26 = arith.constant 0 : index
    %51 = vector.load %arg5[%c3, %c0_26] : memref<8x256xf32, #tpu.memory_space<vmem>>, vector<1x10xf32>
    %c4 = arith.constant 4 : index
    %c0_27 = arith.constant 0 : index
    %52 = vector.load %arg5[%c4, %c0_27] : memref<8x256xf32, #tpu.memory_space<vmem>>, vector<1x10xf32>
    %cst_28 = arith.constant dense<0.000000e+00> : vector<64xf32>
    %53 = vector.multi_reduction <add>, %49, %cst_28 [1] : vector<64x10xf32> to vector<64xf32>
    %54 = vector.shape_cast %53 : vector<64xf32> to vector<64x1xf32>
    %cst_29 = arith.constant 1.000000e+01 : f32
    %55 = vector.broadcast %cst_29 : f32 to vector<64x1xf32>
    %56 = arith.divf %54, %55 : vector<64x1xf32>
    %57 = vector.broadcast %56 : vector<64x1xf32> to vector<64x10xf32>
    %58 = arith.subf %49, %57 : vector<64x10xf32>
    %59 = vector.broadcast %56 : vector<64x1xf32> to vector<64x10xf32>
    %60 = arith.subf %49, %59 : vector<64x10xf32>
    %61 = arith.mulf %58, %60 : vector<64x10xf32>
    %cst_30 = arith.constant dense<0.000000e+00> : vector<64xf32>
    %62 = vector.multi_reduction <add>, %61, %cst_30 [1] : vector<64x10xf32> to vector<64xf32>
    %63 = vector.shape_cast %62 : vector<64xf32> to vector<64x1xf32>
    %cst_31 = arith.constant 1.000000e+01 : f32
    %64 = vector.broadcast %cst_31 : f32 to vector<64x1xf32>
    %65 = arith.divf %63, %64 : vector<64x1xf32>
    %66 = vector.broadcast %56 : vector<64x1xf32> to vector<64x10xf32>
    %67 = arith.subf %49, %66 : vector<64x10xf32>
    %cst_32 = arith.constant 9.99999974E-6 : f32
    %68 = vector.broadcast %cst_32 : f32 to vector<64x1xf32>
    %69 = arith.addf %65, %68 : vector<64x1xf32>
    %70 = math.rsqrt %69 : vector<64x1xf32>
    %71 = vector.broadcast %70 : vector<64x1xf32> to vector<64x10xf32>
    %72 = arith.mulf %67, %71 : vector<64x10xf32>
    %73 = vector.broadcast %51 : vector<1x10xf32> to vector<64x10xf32>
    %74 = arith.mulf %72, %73 : vector<64x10xf32>
    %75 = vector.broadcast %52 : vector<1x10xf32> to vector<64x10xf32>
    %76 = arith.addf %74, %75 : vector<64x10xf32>
    %77 = arith.mulf %76, %76 : vector<64x10xf32>
    %cst_33 = arith.constant dense<0.000000e+00> : vector<64xf32>
    %78 = vector.multi_reduction <add>, %77, %cst_33 [1] : vector<64x10xf32> to vector<64xf32>
    %79 = vector.shape_cast %78 : vector<64xf32> to vector<64x1xf32>
    %80 = math.rsqrt %79 : vector<64x1xf32>
    %81 = vector.broadcast %80 : vector<64x1xf32> to vector<64x10xf32>
    %82 = arith.mulf %76, %81 : vector<64x10xf32>
    %c3_34 = arith.constant 3 : index
    %c10 = arith.constant 10 : index
    %83 = vector.load %arg5[%c3_34, %c10] : memref<8x256xf32, #tpu.memory_space<vmem>>, vector<1x10xf32>
    %c4_35 = arith.constant 4 : index
    %c10_36 = arith.constant 10 : index
    %84 = vector.load %arg5[%c4_35, %c10_36] : memref<8x256xf32, #tpu.memory_space<vmem>>, vector<1x10xf32>
    %cst_37 = arith.constant dense<0.000000e+00> : vector<64xf32>
    %85 = vector.multi_reduction <add>, %50, %cst_37 [1] : vector<64x10xf32> to vector<64xf32>
    %86 = vector.shape_cast %85 : vector<64xf32> to vector<64x1xf32>
    %cst_38 = arith.constant 1.000000e+01 : f32
    %87 = vector.broadcast %cst_38 : f32 to vector<64x1xf32>
    %88 = arith.divf %86, %87 : vector<64x1xf32>
    %89 = vector.broadcast %88 : vector<64x1xf32> to vector<64x10xf32>
    %90 = arith.subf %50, %89 : vector<64x10xf32>
    %91 = vector.broadcast %88 : vector<64x1xf32> to vector<64x10xf32>
    %92 = arith.subf %50, %91 : vector<64x10xf32>
    %93 = arith.mulf %90, %92 : vector<64x10xf32>
    %cst_39 = arith.constant dense<0.000000e+00> : vector<64xf32>
    %94 = vector.multi_reduction <add>, %93, %cst_39 [1] : vector<64x10xf32> to vector<64xf32>
    %95 = vector.shape_cast %94 : vector<64xf32> to vector<64x1xf32>
    %cst_40 = arith.constant 1.000000e+01 : f32
    %96 = vector.broadcast %cst_40 : f32 to vector<64x1xf32>
    %97 = arith.divf %95, %96 : vector<64x1xf32>
    %98 = vector.broadcast %88 : vector<64x1xf32> to vector<64x10xf32>
    %99 = arith.subf %50, %98 : vector<64x10xf32>
    %cst_41 = arith.constant 9.99999974E-6 : f32
    %100 = vector.broadcast %cst_41 : f32 to vector<64x1xf32>
    %101 = arith.addf %97, %100 : vector<64x1xf32>
    %102 = math.rsqrt %101 : vector<64x1xf32>
    %103 = vector.broadcast %102 : vector<64x1xf32> to vector<64x10xf32>
    %104 = arith.mulf %99, %103 : vector<64x10xf32>
    %105 = vector.broadcast %83 : vector<1x10xf32> to vector<64x10xf32>
    %106 = arith.mulf %104, %105 : vector<64x10xf32>
    %107 = vector.broadcast %84 : vector<1x10xf32> to vector<64x10xf32>
    %108 = arith.addf %106, %107 : vector<64x10xf32>
    %109 = arith.mulf %108, %108 : vector<64x10xf32>
    %cst_42 = arith.constant dense<0.000000e+00> : vector<64xf32>
    %110 = vector.multi_reduction <add>, %109, %cst_42 [1] : vector<64x10xf32> to vector<64xf32>
    %111 = vector.shape_cast %110 : vector<64xf32> to vector<64x1xf32>
    %112 = math.rsqrt %111 : vector<64x1xf32>
    %113 = vector.broadcast %112 : vector<64x1xf32> to vector<64x10xf32>
    %114 = arith.mulf %108, %113 : vector<64x10xf32>
    %cst_43 = arith.constant dense<0.000000e+00> : vector<64x64xf32>
    %115 = tpu.matmul %82, %114, %cst_43 {dimension_numbers = #tpu.dot_dimension_numbers<[1], [1], [0], [0], [0, 0, 1, 0], [], []>} : vector<64x10xf32>, vector<64x10xf32>, vector<64x64xf32> -> vector<64x64xf32>
    %cst_44 = arith.constant 2.000000e+00 : f32
    %116 = vector.broadcast %cst_44 : f32 to vector<64x64xf32>
    %117 = arith.mulf %115, %116 : vector<64x64xf32>
    %118 = arith.mulf %82, %114 : vector<64x10xf32>
    %cst_45 = arith.constant dense<0.000000e+00> : vector<64xf32>
    %119 = vector.multi_reduction <add>, %118, %cst_45 [1] : vector<64x10xf32> to vector<64xf32>
    %120 = vector.shape_cast %119 : vector<64xf32> to vector<64x1xf32>
    %cst_46 = arith.constant 2.000000e+00 : f32
    %121 = vector.broadcast %cst_46 : f32 to vector<64x1xf32>
    %122 = arith.mulf %120, %121 : vector<64x1xf32>
    %cst_47 = arith.constant dense<0xFF800000> : vector<64xf32>
    %123 = vector.multi_reduction <maximumf>, %117, %cst_47 [1] : vector<64x64xf32> to vector<64xf32>
    %124 = vector.shape_cast %123 : vector<64xf32> to vector<64x1xf32>
    %125 = vector.broadcast %124 : vector<64x1xf32> to vector<64x64xf32>
    %126 = arith.subf %117, %125 : vector<64x64xf32>
    %127 = math.exp %126 : vector<64x64xf32>
    %cst_48 = arith.constant dense<0.000000e+00> : vector<64xf32>
    %128 = vector.multi_reduction <add>, %127, %cst_48 [1] : vector<64x64xf32> to vector<64xf32>
    %129 = vector.shape_cast %128 : vector<64xf32> to vector<64x1xf32>
    %130 = math.log %129 : vector<64x1xf32>
    %131 = arith.addf %124, %130 : vector<64x1xf32>
    %cst_49 = arith.constant dense<0xFF800000> : vector<64xf32>
    %132 = vector.multi_reduction <maximumf>, %117, %cst_49 [0] : vector<64x64xf32> to vector<64xf32>
    %133 = vector.shape_cast %132 : vector<64xf32> to vector<1x64xf32>
    %134 = vector.broadcast %133 : vector<1x64xf32> to vector<64x64xf32>
    %135 = arith.subf %117, %134 : vector<64x64xf32>
    %136 = math.exp %135 : vector<64x64xf32>
    %cst_50 = arith.constant dense<0.000000e+00> : vector<64xf32>
    %137 = vector.multi_reduction <add>, %136, %cst_50 [0] : vector<64x64xf32> to vector<64xf32>
    %138 = vector.shape_cast %137 : vector<64xf32> to vector<1x64xf32>
    %139 = math.log %138 : vector<1x64xf32>
    %140 = arith.addf %133, %139 : vector<1x64xf32>
    %141 = vector.shape_cast %131 : vector<64x1xf32> to vector<1x64x1xf32>
    %cst_51 = arith.constant dense<0.000000e+00> : vector<1xf32>
    %142 = vector.multi_reduction <add>, %141, %cst_51 [1, 2] : vector<1x64x1xf32> to vector<1xf32>
    %143 = vector.shape_cast %142 : vector<1xf32> to vector<1x1x1xf32>
    %144 = vector.extract %143[0, 0, 0] : f32 from vector<1x1x1xf32>
    %cst_52 = arith.constant 6.400000e+01 : f32
    %145 = arith.divf %144, %cst_52 : f32
    %146 = vector.shape_cast %140 : vector<1x64xf32> to vector<1x1x64xf32>
    %cst_53 = arith.constant dense<0.000000e+00> : vector<1xf32>
    %147 = vector.multi_reduction <add>, %146, %cst_53 [1, 2] : vector<1x1x64xf32> to vector<1xf32>
    %148 = vector.shape_cast %147 : vector<1xf32> to vector<1x1x1xf32>
    %149 = vector.extract %148[0, 0, 0] : f32 from vector<1x1x1xf32>
    %cst_54 = arith.constant 6.400000e+01 : f32
    %150 = arith.divf %149, %cst_54 : f32
    %151 = arith.addf %145, %150 : f32
    %cst_55 = arith.constant 5.000000e-01 : f32
    %152 = arith.mulf %cst_55, %151 : f32
    %153 = vector.shape_cast %122 : vector<64x1xf32> to vector<1x64x1xf32>
    %cst_56 = arith.constant dense<0.000000e+00> : vector<1xf32>
    %154 = vector.multi_reduction <add>, %153, %cst_56 [1, 2] : vector<1x64x1xf32> to vector<1xf32>
    %155 = vector.shape_cast %154 : vector<1xf32> to vector<1x1x1xf32>
    %156 = vector.extract %155[0, 0, 0] : f32 from vector<1x1x1xf32>
    %cst_57 = arith.constant 6.400000e+01 : f32
    %157 = arith.divf %156, %cst_57 : f32
    %158 = arith.subf %152, %157 : f32
    %c0_58 = arith.constant 0 : index
    %c0_59 = arith.constant 0 : index
    %159 = memref.load %arg6[%c0_58, %c0_59] : memref<1x1xf32, #tpu.memory_space<smem>>
    memref.store %158, %arg6[%c0_58, %c0_59] : memref<1x1xf32, #tpu.memory_space<smem>>
    return
  }
}

</mosaic_0001>

<llo_original>
// kernel: bimodal_forward.1
$region0: #{bimodal_forward.1}
  #allocation0 [shape = 'u32[]', space=smem, size = 0x4, offset = 0x4, fixed_abs, tag = 'smem constant byte address 0x4 - core index']
  #allocation1 [shape = 'u32[144,128]{1,0:T(1,128)}', space=vmem, size = 0x12000, scoped, tag = 'internal scratch']
  %s0 = inlined_call_operand.vmem [shape: bf16[64,128], index: 0, kind: input, shape index: {}]
  %s1 = inlined_call_operand.hbm [shape: bf16[64,1024], index: 1, kind: input, shape index: {}]
  %s2 = inlined_call_operand.vmem [shape: bf16[128,256], index: 2, kind: input, shape index: {}]
  %s3 = inlined_call_operand.hbm [shape: bf16[1024,256], index: 3, kind: input, shape index: {}]
  %s4 = inlined_call_operand.vmem [shape: bf16[256,20], index: 4, kind: input, shape index: {}]
  %s5 = inlined_call_operand.hbm [shape: f32[8,256], index: 5, kind: input, shape index: {}]
  %s6 = inlined_call_operand.hbm [shape: f32[1,1], index: 6, kind: output, shape index: {}]
  %s7 = sld [smem:[#allocation0]]
  $region46: #{bimodal_forward.1} parent=0
    _
  %s9 = ssub.s32 1, %s7
  %s10 = scalar_select 0, %s9, %s7
  $region1: #{bimodal_forward.1} parent=0
    #allocation2 [shape = 'u8[131072]{0}', space=vmem, size = 0x20000, scoped, tag = 'input window, operand 1, single buffered']
    #allocation3 [shape = 's32[1]{0}', space=sflag, size = 0x4, scoped, tag = 'scoped memory for bimodal_forward.1']
    #allocation4 [shape = 's32[1]{0}', space=sflag, size = 0x4, scoped, tag = 'scoped memory for bimodal_forward.1']
    #allocation5 [shape = 'u8[524288]{0}', space=vmem, size = 0x80000, scoped, tag = 'input window, operand 3, single buffered']
    #allocation6 [shape = 's32[1]{0}', space=sflag, size = 0x4, scoped, tag = 'scoped memory for bimodal_forward.1']
    #allocation7 [shape = 'u8[8192]{0}', space=vmem, size = 0x2000, scoped, tag = 'input window, operand 5, single buffered']
    #allocation8 [shape = 'u8[512]{0}', space=smem, size = 0x200, scoped, tag = 'output window, operand 0, single buffered']
    %11 = vsyncpa [#allocation3], 0
    %12 = vsyncpa [#allocation6], 0
    %13 = vsyncpa [#allocation4], 0
    // Predicated region
    $region2: #{bimodal_forward.1} parent=1 // pred_check
      _
    $region3: #{bimodal_forward.1} parent=1 // pred_check_branch
      %15 = sbr.rel (0) target = $region5
    $region4: #{bimodal_forward.1} parent=1 // pred_region
      _
    $region5: #{bimodal_forward.1} parent=1 // pred_fallthru
      _
    // Predicated region
    $region6: #{bimodal_forward.1} parent=1 // pred_check
      _
    $region7: #{bimodal_forward.1} parent=1 // pred_check_branch
      %17 = sbr.rel (0) target = $region9
    $region8: #{bimodal_forward.1} parent=1 // pred_region
      %s19 = ssub.s32 4096, 4096
      %20 = vsyncadd [#allocation3], %s19
      %s21 = sshll.u32 [#allocation2], 4
      %s22 = int_to_ptr.vmem [resolvable:$true] %s21
      %27 = dma.hbm_to_vmem [thread:$0]  %s1, 4096, %s22, [#allocation3], 512, 512, 32
    $region9: #{bimodal_forward.1} parent=1 // pred_fallthru
      _
    // Predicated region
    $region10: #{bimodal_forward.1} parent=1 // pred_check
      _
    $region11: #{bimodal_forward.1} parent=1 // pred_check_branch
      %29 = sbr.rel (0) target = $region13
    $region12: #{bimodal_forward.1} parent=1 // pred_region
      _
    $region13: #{bimodal_forward.1} parent=1 // pred_fallthru
      _
    // Predicated region
    $region14: #{bimodal_forward.1} parent=1 // pred_check
      _
    $region15: #{bimodal_forward.1} parent=1 // pred_check_branch
      %31 = sbr.rel (0) target = $region17
    $region16: #{bimodal_forward.1} parent=1 // pred_region
      %s33 = ssub.s32 16384, 16384
      %34 = vsyncadd [#allocation6], %s33
      %s35 = sshll.u32 [#allocation5], 4
      %s36 = int_to_ptr.vmem [resolvable:$true] %s35
      %41 = dma.hbm_to_vmem [thread:$0]  %s3, 16384, %s36, [#allocation6], 128, 128, 8
    $region17: #{bimodal_forward.1} parent=1 // pred_fallthru
      _
    // Predicated region
    $region18: #{bimodal_forward.1} parent=1 // pred_check
      _
    $region19: #{bimodal_forward.1} parent=1 // pred_check_branch
      %43 = sbr.rel (0) target = $region21
    $region20: #{bimodal_forward.1} parent=1 // pred_region
      _
    $region21: #{bimodal_forward.1} parent=1 // pred_fallthru
      _
    // Predicated region
    $region22: #{bimodal_forward.1} parent=1 // pred_check
      _
    $region23: #{bimodal_forward.1} parent=1 // pred_check_branch
      %45 = sbr.rel (0) target = $region25
    $region24: #{bimodal_forward.1} parent=1 // pred_region
      %s47 = ssub.s32 256, 256
      %48 = vsyncadd [#allocation6], %s47
      %s50 = sshll.u32 [#allocation7], 4
      %s51 = int_to_ptr.vmem [resolvable:$true] %s50
      %53 = dma.hbm_to_vmem [thread:$0]  %s5, 256, %s51, [#allocation6]
    $region25: #{bimodal_forward.1} parent=1 // pred_fallthru
      _
    // Predicated region
    $region26: #{bimodal_forward.1} parent=1 // pred_check
      _
    $region27: #{bimodal_forward.1} parent=1 // pred_check_branch
      %55 = sbr.rel (0) target = $region29
    $region28: #{bimodal_forward.1} parent=1 // pred_region
      %56 = dma.done [#allocation3], 4096
    $region29: #{bimodal_forward.1} parent=1 // pred_fallthru
      _
    // Predicated region
    $region30: #{bimodal_forward.1} parent=1 // pred_check
      _
    $region31: #{bimodal_forward.1} parent=1 // pred_check_branch
      %58 = sbr.rel (0) target = $region33
    $region32: #{bimodal_forward.1} parent=1 // pred_region
      %59 = dma.done [#allocation6], 16384
    $region33: #{bimodal_forward.1} parent=1 // pred_fallthru
      _
    // Predicated region
    $region34: #{bimodal_forward.1} parent=1 // pred_check
      _
    $region35: #{bimodal_forward.1} parent=1 // pred_check_branch
      %61 = sbr.rel (0) target = $region37
    $region36: #{bimodal_forward.1} parent=1 // pred_region
      %62 = dma.done [#allocation6], 256
    $region37: #{bimodal_forward.1} parent=1 // pred_fallthru
      _
    %v64 = vld [vmem:[#allocation7] ss:$8 sm:$0x3]
    %s65 = scalar_lea.vmem [#allocation7], 1
    %v66 = vld [vmem:[%s65] ss:$8 sm:$0x3]
    %v67 = vld [vmem:[#allocation7 + $0x2] ss:$0 sm:$0xff]
    %v68 = vld [vmem:[%s0] sm:$0xf]
    %v69 = vld [vmem:[%s0 + $0x4] sm:$0xf]
    %v70 = vld [vmem:[%s0 + $0x8] sm:$0xf]
    %v71 = vld [vmem:[%s0 + $0xc] sm:$0xf]
    %v72 = vld [vmem:[%s0 + $0x10] sm:$0xf]
    %v73 = vld [vmem:[%s0 + $0x14] sm:$0xf]
    %v74 = vld [vmem:[%s0 + $0x18] sm:$0xf]
    %v75 = vld [vmem:[%s0 + $0x1c] sm:$0xf]
    %v76 = vld [vmem:[%s2] sm:$0xff]
    %v77 = vld [vmem:[%s2 + $0x8] sm:$0xff]
    %v78 = vld [vmem:[%s2 + $0x10] sm:$0xff]
    %v79 = vld [vmem:[%s2 + $0x18] sm:$0xff]
    %v80 = vld [vmem:[%s2 + $0x20] sm:$0xff]
    %v81 = vld [vmem:[%s2 + $0x28] sm:$0xff]
    %v82 = vld [vmem:[%s2 + $0x30] sm:$0xff]
    %v83 = vld [vmem:[%s2 + $0x38] sm:$0xff]
    %v84 = vld [vmem:[%s2 + $0x40] sm:$0xff]
    %v85 = vld [vmem:[%s2 + $0x48] sm:$0xff]
    %v86 = vld [vmem:[%s2 + $0x50] sm:$0xff]
    %v87 = vld [vmem:[%s2 + $0x58] sm:$0xff]
    %v88 = vld [vmem:[%s2 + $0x60] sm:$0xff]
    %v89 = vld [vmem:[%s2 + $0x68] sm:$0xff]
    %v90 = vld [vmem:[%s2 + $0x70] sm:$0xff]
    %v91 = vld [vmem:[%s2 + $0x78] sm:$0xff]
    %v93 = vlaneseq
    %v94 = vshrl.u32 %v93, 7
    %v95 = vsub.s32 0, %v94
    %v96 = vrot.slane %v64, %v95
    %v97 = vlaneseq
    %v98 = vshrl.u32 %v97, 7
    %v99 = vsub.s32 1, %v98
    %v100 = vrot.slane %v64, %v99
    %v111 = vunpack.c.l.b16 %v68
    %v112 = vunpack.c.l.b16 %v69
    %v113 = vunpack.c.l.b16 %v70
    %v114 = vunpack.c.l.b16 %v71
    %v115 = vunpack.c.l.b16 %v72
    %v116 = vunpack.c.l.b16 %v73
    %v117 = vunpack.c.l.b16 %v74
    %v118 = vunpack.c.l.b16 %v75
    %v119 = vpack.c.b16 %v112, %v111
    %v120 = vpack.c.b16 %v114, %v113
    %v121 = vpack.c.b16 %v116, %v115
    %v122 = vpack.c.b16 %v118, %v117
    %v143 = vunpack.c.l.b16 %v76
    %v144 = vunpack.c.h.b16 %v76
    %v145 = vunpack.c.l.b16 %v77
    %v146 = vunpack.c.h.b16 %v77
    %v147 = vunpack.c.l.b16 %v78
    %v148 = vunpack.c.h.b16 %v78
    %v149 = vunpack.c.l.b16 %v79
    %v150 = vunpack.c.h.b16 %v79
    %v151 = vunpack.c.l.b16 %v80
    %v152 = vunpack.c.h.b16 %v80
    %v153 = vunpack.c.l.b16 %v81
    %v154 = vunpack.c.h.b16 %v81
    %v155 = vunpack.c.l.b16 %v82
    %v156 = vunpack.c.h.b16 %v82
    %v157 = vunpack.c.l.b16 %v83
    %v158 = vunpack.c.h.b16 %v83
    %v159 = vunpack.c.l.b16 %v84
    %v160 = vunpack.c.h.b16 %v84
    %v161 = vunpack.c.l.b16 %v85
    %v162 = vunpack.c.h.b16 %v85
    %v163 = vunpack.c.l.b16 %v86
    %v164 = vunpack.c.h.b16 %v86
    %v165 = vunpack.c.l.b16 %v87
    %v166 = vunpack.c.h.b16 %v87
    %v167 = vunpack.c.l.b16 %v88
    %v168 = vunpack.c.h.b16 %v88
    %v169 = vunpack.c.l.b16 %v89
    %v170 = vunpack.c.h.b16 %v89
    %v171 = vunpack.c.l.b16 %v90
    %v172 = vunpack.c.h.b16 %v90
    %v173 = vunpack.c.l.b16 %v91
    %v174 = vunpack.c.h.b16 %v91
    %v175 = vpack.c.b16 %v145, %v143
    %v176 = vpack.c.b16 %v146, %v144
    %v177 = vpack.c.b16 %v149, %v147
    %v178 = vpack.c.b16 %v150, %v148
    %v179 = vpack.c.b16 %v153, %v151
    %v180 = vpack.c.b16 %v154, %v152
    %v181 = vpack.c.b16 %v157, %v155
    %v182 = vpack.c.b16 %v158, %v156
    %v183 = vpack.c.b16 %v161, %v159
    %v184 = vpack.c.b16 %v162, %v160
    %v185 = vpack.c.b16 %v165, %v163
    %v186 = vpack.c.b16 %v166, %v164
    %v187 = vpack.c.b16 %v169, %v167
    %v188 = vpack.c.b16 %v170, %v168
    %v189 = vpack.c.b16 %v173, %v171
    %v190 = vpack.c.b16 %v174, %v172
    %207 = vmatprep.subr.bf16.mxu0 %v176
    %208 = vmatpush1.bf16.msra.mxu0 %v175
    %209 = vmatprep.subr.bf16.mxu0 %v178
    %210 = vmatpush1.bf16.msra.mxu0 %v177
    %211 = vmatprep.subr.bf16.mxu0 %v180
    %212 = vmatpush1.bf16.msra.mxu0 %v179
    %213 = vmatprep.subr.bf16.mxu0 %v182
    %214 = vmatpush1.bf16.msra.mxu0 %v181
    %215 = vmatprep.subr.bf16.mxu0 %v184
    %216 = vmatpush1.bf16.msra.mxu0 %v183
    %217 = vmatprep.subr.bf16.mxu0 %v186
    %218 = vmatpush1.bf16.msra.mxu0 %v185
    %219 = vmatprep.subr.bf16.mxu0 %v188
    %220 = vmatpush1.bf16.msra.mxu0 %v187
    %221 = vmatprep.subr.bf16.mxu0 %v190
    %222 = vmatpush1.bf16.msra.mxu0 %v189
    %223 = vmatprep.subr.bf16.mxu0 0
    %224 = vmatpush1.bf16.msra.mxu0 0
    %225 = vmatprep.subr.bf16.mxu0 0
    %226 = vmatpush1.bf16.msra.mxu0 0
    %227 = vmatprep.subr.bf16.mxu0 0
    %228 = vmatpush1.bf16.msra.mxu0 0
    %229 = vmatprep.subr.bf16.mxu0 0
    %230 = vmatpush1.bf16.msra.mxu0 0
    %231 = vmatprep.subr.bf16.mxu0 0
    %232 = vmatpush1.bf16.msra.mxu0 0
    %233 = vmatprep.subr.bf16.mxu0 0
    %234 = vmatpush1.bf16.msra.mxu0 0
    %235 = vmatprep.subr.bf16.mxu0 0
    %236 = vmatpush1.bf16.msra.mxu0 0
    %237 = vmatprep.subr.bf16.mxu0 0
    %238 = vmatpush1.bf16.msra.mxu0 0
    %239 = vmatprep.mubr.bf16.mxu0 0
    %240 = vmatmul.mubr.bf16.gmra.mrb[0].mxu0 %v119
    %v241 = vpop.f32.mrb[0].mxu0
    %v242 = vadd.f32 %v96, %v241
    %v243 = vpop.f32.mrb[0].mxu0
    %v244 = vadd.f32 %v100, %v243
    %v245 = vpop.f32.mrb[0].mxu0
    %v246 = vadd.f32 %v96, %v245
    %v247 = vpop.f32.mrb[0].mxu0
    %v248 = vadd.f32 %v100, %v247
    %249 = vmatprep.mubr.bf16.mxu0 0
    %250 = vmatmul.mubr.bf16.gmra.mrb[0].mxu0 %v120
    %v251 = vpop.f32.mrb[0].mxu0
    %v252 = vadd.f32 %v96, %v251
    %v253 = vpop.f32.mrb[0].mxu0
    %v254 = vadd.f32 %v100, %v253
    %v255 = vpop.f32.mrb[0].mxu0
    %v256 = vadd.f32 %v96, %v255
    %v257 = vpop.f32.mrb[0].mxu0
    %v258 = vadd.f32 %v100, %v257
    %259 = vmatprep.mubr.bf16.mxu0 0
    %260 = vmatmul.mubr.bf16.gmra.mrb[0].mxu0 %v121
    %v261 = vpop.f32.mrb[0].mxu0
    %v262 = vadd.f32 %v96, %v261
    %v263 = vpop.f32.mrb[0].mxu0
    %v264 = vadd.f32 %v100, %v263
    %v265 = vpop.f32.mrb[0].mxu0
    %v266 = vadd.f32 %v96, %v265
    %v267 = vpop.f32.mrb[0].mxu0
    %v268 = vadd.f32 %v100, %v267
    %269 = vmatprep.mubr.bf16.mxu0 0
    %270 = vmatmul.mubr.bf16.gmra.mrb[0].mxu0 %v122
    %v271 = vpop.f32.mrb[0].mxu0
    %v272 = vadd.f32 %v96, %v271
    %v273 = vpop.f32.mrb[0].mxu0
    %v274 = vadd.f32 %v100, %v273
    %v275 = vpop.f32.mrb[0].mxu0
    %v276 = vadd.f32 %v96, %v275
    %v277 = vpop.f32.mrb[0].mxu0
    %v278 = vadd.f32 %v100, %v277
    %279 = vdwg.mxu0
    %v280 = vld [vmem:[#allocation2] sm:$0xff]
    %v281 = vld [vmem:[#allocation2 + $0x8] sm:$0xff]
    %v282 = vld [vmem:[#allocation2 + $0x10] sm:$0xff]
    %v283 = vld [vmem:[#allocation2 + $0x18] sm:$0xff]
    %v284 = vld [vmem:[#allocation2 + $0x20] sm:$0xff]
    %v285 = vld [vmem:[#allocation2 + $0x28] sm:$0xff]
    %v286 = vld [vmem:[#allocation2 + $0x30] sm:$0xff]
    %v287 = vld [vmem:[#allocation2 + $0x38] sm:$0xff]
    %v288 = vld [vmem:[#allocation2 + $0x40] sm:$0xff]
    %v289 = vld [vmem:[#allocation2 + $0x48] sm:$0xff]
    %v290 = vld [vmem:[#allocation2 + $0x50] sm:$0xff]
    %v291 = vld [vmem:[#allocation2 + $0x58] sm:$0xff]
    %v292 = vld [vmem:[#allocation2 + $0x60] sm:$0xff]
    %v293 = vld [vmem:[#allocation2 + $0x68] sm:$0xff]
    %v294 = vld [vmem:[#allocation2 + $0x70] sm:$0xff]
    %v295 = vld [vmem:[#allocation2 + $0x78] sm:$0xff]
    %v296 = vld [vmem:[#allocation2 + $0x80] sm:$0xff]
    %v297 = vld [vmem:[#allocation2 + $0x88] sm:$0xff]
    %v298 = vld [vmem:[#allocation2 + $0x90] sm:$0xff]
    %v299 = vld [vmem:[#allocation2 + $0x98] sm:$0xff]
    %v300 = vld [vmem:[#allocation2 + $0xa0] sm:$0xff]
    %v301 = vld [vmem:[#allocation2 + $0xa8] sm:$0xff]
    %v302 = vld [vmem:[#allocation2 + $0xb0] sm:$0xff]
    %v303 = vld [vmem:[#allocation2 + $0xb8] sm:$0xff]
    %v304 = vld [vmem:[#allocation2 + $0xc0] sm:$0xff]
    %v305 = vld [vmem:[#allocation2 + $0xc8] sm:$0xff]
    %v306 = vld [vmem:[#allocation2 + $0xd0] sm:$0xff]
    %v307 = vld [vmem:[#allocation2 + $0xd8] sm:$0xff]
    %v308 = vld [vmem:[#allocation2 + $0xe0] sm:$0xff]
    %v309 = vld [vmem:[#allocation2 + $0xe8] sm:$0xff]
    %v310 = vld [vmem:[#allocation2 + $0xf0] sm:$0xff]
    %v311 = vld [vmem:[#allocation2 + $0xf8] sm:$0xff]
    %v312 = vld [vmem:[#allocation5] sm:$0xff]
    %v313 = vld [vmem:[#allocation5 + $0x8] sm:$0xff]
    %v314 = vld [vmem:[#allocation5 + $0x10] sm:$0xff]
    %v315 = vld [vmem:[#allocation5 + $0x18] sm:$0xff]
    %v316 = vld [vmem:[#allocation5 + $0x20] sm:$0xff]
    %v317 = vld [vmem:[#allocation5 + $0x28] sm:$0xff]
    %v318 = vld [vmem:[#allocation5 + $0x30] sm:$0xff]
    %v319 = vld [vmem:[#allocation5 + $0x38] sm:$0xff]
    %v320 = vld [vmem:[#allocation5 + $0x40] sm:$0xff]
    %v321 = vld [vmem:[#allocation5 + $0x48] sm:$0xff]
    %v322 = vld [vmem:[#allocation5 + $0x50] sm:$0xff]
    %v323 = vld [vmem:[#allocation5 + $0x58] sm:$0xff]
    %v324 = vld [vmem:[#allocation5 + $0x60] sm:$0xff]
    %v325 = vld [vmem:[#allocation5 + $0x68] sm:$0xff]
    %v326 = vld [vmem:[#allocation5 + $0x70] sm:$0xff]
    %v327 = vld [vmem:[#allocation5 + $0x78] sm:$0xff]
    %v328 = vld [vmem:[#allocation5 + $0x80] sm:$0xff]
    %v329 = vld [vmem:[#allocation5 + $0x88] sm:$0xff]
    %v330 = vld [vmem:[#allocation5 + $0x90] sm:$0xff]
    %v331 = vld [vmem:[#allocation5 + $0x98] sm:$0xff]
    %v332 = vld [vmem:[#allocation5 + $0xa0] sm:$0xff]
    %v333 = vld [vmem:[#allocation5 + $0xa8] sm:$0xff]
    %v334 = vld [vmem:[#allocation5 + $0xb0] sm:$0xff]
    %v335 = vld [vmem:[#allocation5 + $0xb8] sm:$0xff]
    %v336 = vld [vmem:[#allocation5 + $0xc0] sm:$0xff]
    %v337 = vld [vmem:[#allocation5 + $0xc8] sm:$0xff]
    %v338 = vld [vmem:[#allocation5 + $0xd0] sm:$0xff]
    %v339 = vld [vmem:[#allocation5 + $0xd8] sm:$0xff]
    %v340 = vld [vmem:[#allocation5 + $0xe0] sm:$0xff]
    %v341 = vld [vmem:[#allocation5 + $0xe8] sm:$0xff]
    %v342 = vld [vmem:[#allocation5 + $0xf0] sm:$0xff]
    %v343 = vld [vmem:[#allocation5 + $0xf8] sm:$0xff]
    %v344 = vld [vmem:[#allocation5 + $0x100] sm:$0xff]
    %v345 = vld [vmem:[#allocation5 + $0x108] sm:$0xff]
    %v346 = vld [vmem:[#allocation5 + $0x110] sm:$0xff]
    %v347 = vld [vmem:[#allocation5 + $0x118] sm:$0xff]
    %v348 = vld [vmem:[#allocation5 + $0x120] sm:$0xff]
    %v349 = vld [vmem:[#allocation5 + $0x128] sm:$0xff]
    %v350 = vld [vmem:[#allocation5 + $0x130] sm:$0xff]
    %v351 = vld [vmem:[#allocation5 + $0x138] sm:$0xff]
    %v352 = vld [vmem:[#allocation5 + $0x140] sm:$0xff]
    %v353 = vld [vmem:[#allocation5 + $0x148] sm:$0xff]
    %v354 = vld [vmem:[#allocation5 + $0x150] sm:$0xff]
    %v355 = vld [vmem:[#allocation5 + $0x158] sm:$0xff]
    %v356 = vld [vmem:[#allocation5 + $0x160] sm:$0xff]
    %v357 = vld [vmem:[#allocation5 + $0x168] sm:$0xff]
    %v358 = vld [vmem:[#allocation5 + $0x170] sm:$0xff]
    %v359 = vld [vmem:[#allocation5 + $0x178] sm:$0xff]
    %v360 = vld [vmem:[#allocation5 + $0x180] sm:$0xff]
    %v361 = vld [vmem:[#allocation5 + $0x188] sm:$0xff]
    %v362 = vld [vmem:[#allocation5 + $0x190] sm:$0xff]
    %v363 = vld [vmem:[#allocation5 + $0x198] sm:$0xff]
    %v364 = vld [vmem:[#allocation5 + $0x1a0] sm:$0xff]
    %v365 = vld [vmem:[#allocation5 + $0x1a8] sm:$0xff]
    %v366 = vld [vmem:[#allocation5 + $0x1b0] sm:$0xff]
    %v367 = vld [vmem:[#allocation5 + $0x1b8] sm:$0xff]
    %v368 = vld [vmem:[#allocation5 + $0x1c0] sm:$0xff]
    %v369 = vld [vmem:[#allocation5 + $0x1c8] sm:$0xff]
    %v370 = vld [vmem:[#allocation5 + $0x1d0] sm:$0xff]
    %v371 = vld [vmem:[#allocation5 + $0x1d8] sm:$0xff]
    %v372 = vld [vmem:[#allocation5 + $0x1e0] sm:$0xff]
    %v373 = vld [vmem:[#allocation5 + $0x1e8] sm:$0xff]
    %v374 = vld [vmem:[#allocation5 + $0x1f0] sm:$0xff]
    %v375 = vld [vmem:[#allocation5 + $0x1f8] sm:$0xff]
    %v376 = vld [vmem:[#allocation5 + $0x200] sm:$0xff]
    %v377 = vld [vmem:[#allocation5 + $0x208] sm:$0xff]
    %v378 = vld [vmem:[#allocation5 + $0x210] sm:$0xff]
    %v379 = vld [vmem:[#allocation5 + $0x218] sm:$0xff]
    %v380 = vld [vmem:[#allocation5 + $0x220] sm:$0xff]
    %v381 = vld [vmem:[#allocation5 + $0x228] sm:$0xff]
    %v382 = vld [vmem:[#allocation5 + $0x230] sm:$0xff]
    %v383 = vld [vmem:[#allocation5 + $0x238] sm:$0xff]
    %v384 = vld [vmem:[#allocation5 + $0x240] sm:$0xff]
    %v385 = vld [vmem:[#allocation5 + $0x248] sm:$0xff]
    %v386 = vld [vmem:[#allocation5 + $0x250] sm:$0xff]
    %v387 = vld [vmem:[#allocation5 + $0x258] sm:$0xff]
    %v388 = vld [vmem:[#allocation5 + $0x260] sm:$0xff]
    %v389 = vld [vmem:[#allocation5 + $0x268] sm:$0xff]
    %v390 = vld [vmem:[#allocation5 + $0x270] sm:$0xff]
    %v391 = vld [vmem:[#allocation5 + $0x278] sm:$0xff]
    %v392 = vld [vmem:[#allocation5 + $0x280] sm:$0xff]
    %v393 = vld [vmem:[#allocation5 + $0x288] sm:$0xff]
    %v394 = vld [vmem:[#allocation5 + $0x290] sm:$0xff]
    %v395 = vld [vmem:[#allocation5 + $0x298] sm:$0xff]
    %v396 = vld [vmem:[#allocation5 + $0x2a0] sm:$0xff]
    %v397 = vld [vmem:[#allocation5 + $0x2a8] sm:$0xff]
    %v398 = vld [vmem:[#allocation5 + $0x2b0] sm:$0xff]
    %v399 = vld [vmem:[#allocation5 + $0x2b8] sm:$0xff]
    %v400 = vld [vmem:[#allocation5 + $0x2c0] sm:$0xff]
    %v401 = vld [vmem:[#allocation5 + $0x2c8] sm:$0xff]
    %v402 = vld [vmem:[#allocation5 + $0x2d0] sm:$0xff]
    %v403 = vld [vmem:[#allocation5 + $0x2d8] sm:$0xff]
    %v404 = vld [vmem:[#allocation5 + $0x2e0] sm:$0xff]
    %v405 = vld [vmem:[#allocation5 + $0x2e8] sm:$0xff]
    %v406 = vld [vmem:[#allocation5 + $0x2f0] sm:$0xff]
    %v407 = vld [vmem:[#allocation5 + $0x2f8] sm:$0xff]
    %v408 = vld [vmem:[#allocation5 + $0x300] sm:$0xff]
    %v409 = vld [vmem:[#allocation5 + $0x308] sm:$0xff]
    %v410 = vld [vmem:[#allocation5 + $0x310] sm:$0xff]
    %v411 = vld [vmem:[#allocation5 + $0x318] sm:$0xff]
    %v412 = vld [vmem:[#allocation5 + $0x320] sm:$0xff]
    %v413 = vld [vmem:[#allocation5 + $0x328] sm:$0xff]
    %v414 = vld [vmem:[#allocation5 + $0x330] sm:$0xff]
    %v415 = vld [vmem:[#allocation5 + $0x338] sm:$0xff]
    %v416 = vld [vmem:[#allocation5 + $0x340] sm:$0xff]
    %v417 = vld [vmem:[#allocation5 + $0x348] sm:$0xff]
    %v418 = vld [vmem:[#allocation5 + $0x350] sm:$0xff]
    %v419 = vld [vmem:[#allocation5 + $0x358] sm:$0xff]
    %v420 = vld [vmem:[#allocation5 + $0x360] sm:$0xff]
    %v421 = vld [vmem:[#allocation5 + $0x368] sm:$0xff]
    %v422 = vld [vmem:[#allocation5 + $0x370] sm:$0xff]
    %v423 = vld [vmem:[#allocation5 + $0x378] sm:$0xff]
    %v424 = vld [vmem:[#allocation5 + $0x380] sm:$0xff]
    %v425 = vld [vmem:[#allocation5 + $0x388] sm:$0xff]
    %v426 = vld [vmem:[#allocation5 + $0x390] sm:$0xff]
    %v427 = vld [vmem:[#allocation5 + $0x398] sm:$0xff]
    %v428 = vld [vmem:[#allocation5 + $0x3a0] sm:$0xff]
    %v429 = vld [vmem:[#allocation5 + $0x3a8] sm:$0xff]
    %v430 = vld [vmem:[#allocation5 + $0x3b0] sm:$0xff]
    %v431 = vld [vmem:[#allocation5 + $0x3b8] sm:$0xff]
    %v432 = vld [vmem:[#allocation5 + $0x3c0] sm:$0xff]
    %v433 = vld [vmem:[#allocation5 + $0x3c8] sm:$0xff]
    %v434 = vld [vmem:[#allocation5 + $0x3d0] sm:$0xff]
    %v435 = vld [vmem:[#allocation5 + $0x3d8] sm:$0xff]
    %v436 = vld [vmem:[#allocation5 + $0x3e0] sm:$0xff]
    %v437 = vld [vmem:[#allocation5 + $0x3e8] sm:$0xff]
    %v438 = vld [vmem:[#allocation5 + $0x3f0] sm:$0xff]
    %v439 = vld [vmem:[#allocation5 + $0x3f8] sm:$0xff]
    %v441 = vlaneseq
    %v442 = vshrl.u32 %v441, 7
    %v443 = vsub.s32 0, %v442
    %v444 = vrot.slane %v66, %v443
    %v445 = vlaneseq
    %v446 = vshrl.u32 %v445, 7
    %v447 = vsub.s32 1, %v446
    %v448 = vrot.slane %v66, %v447
    %v483 = vunpack.c.l.b16 %v280
    %v484 = vunpack.c.h.b16 %v280
    %v485 = vunpack.c.l.b16 %v281
    %v486 = vunpack.c.h.b16 %v281
    %v487 = vunpack.c.l.b16 %v282
    %v488 = vunpack.c.h.b16 %v282
    %v489 = vunpack.c.l.b16 %v283
    %v490 = vunpack.c.h.b16 %v283
    %v491 = vunpack.c.l.b16 %v284
    %v492 = vunpack.c.h.b16 %v284
    %v493 = vunpack.c.l.b16 %v285
    %v494 = vunpack.c.h.b16 %v285
    %v495 = vunpack.c.l.b16 %v286
    %v496 = vunpack.c.h.b16 %v286
    %v497 = vunpack.c.l.b16 %v287
    %v498 = vunpack.c.h.b16 %v287
    %v499 = vunpack.c.l.b16 %v288
    %v500 = vunpack.c.h.b16 %v288
    %v501 = vunpack.c.l.b16 %v289
    %v502 = vunpack.c.h.b16 %v289
    %v503 = vunpack.c.l.b16 %v290
    %v504 = vunpack.c.h.b16 %v290
    %v505 = vunpack.c.l.b16 %v291
    %v506 = vunpack.c.h.b16 %v291
    %v507 = vunpack.c.l.b16 %v292
    %v508 = vunpack.c.h.b16 %v292
    %v509 = vunpack.c.l.b16 %v293
    %v510 = vunpack.c.h.b16 %v293
    %v511 = vunpack.c.l.b16 %v294
    %v512 = vunpack.c.h.b16 %v294
    %v513 = vunpack.c.l.b16 %v295
    %v514 = vunpack.c.h.b16 %v295
    %v515 = vunpack.c.l.b16 %v296
    %v516 = vunpack.c.h.b16 %v296
    %v517 = vunpack.c.l.b16 %v297
    %v518 = vunpack.c.h.b16 %v297
    %v519 = vunpack.c.l.b16 %v298
    %v520 = vunpack.c.h.b16 %v298
    %v521 = vunpack.c.l.b16 %v299
    %v522 = vunpack.c.h.b16 %v299
    %v523 = vunpack.c.l.b16 %v300
    %v524 = vunpack.c.h.b16 %v300
    %v525 = vunpack.c.l.b16 %v301
    %v526 = vunpack.c.h.b16 %v301
    %v527 = vunpack.c.l.b16 %v302
    %v528 = vunpack.c.h.b16 %v302
    %v529 = vunpack.c.l.b16 %v303
    %v530 = vunpack.c.h.b16 %v303
    %v531 = vunpack.c.l.b16 %v304
    %v532 = vunpack.c.h.b16 %v304
    %v533 = vunpack.c.l.b16 %v305
    %v534 = vunpack.c.h.b16 %v305
    %v535 = vunpack.c.l.b16 %v306
    %v536 = vunpack.c.h.b16 %v306
    %v537 = vunpack.c.l.b16 %v307
    %v538 = vunpack.c.h.b16 %v307
    %v539 = vunpack.c.l.b16 %v308
    %v540 = vunpack.c.h.b16 %v308
    %v541 = vunpack.c.l.b16 %v309
    %v542 = vunpack.c.h.b16 %v309
    %v543 = vunpack.c.l.b16 %v310
    %v544 = vunpack.c.h.b16 %v310
    %v545 = vunpack.c.l.b16 %v311
    %v546 = vunpack.c.h.b16 %v311
    %v547 = vpack.c.b16 %v491, %v483
    %v548 = vpack.c.b16 %v492, %v484
    %v549 = vpack.c.b16 %v493, %v485
    %v550 = vpack.c.b16 %v494, %v486
    %v551 = vpack.c.b16 %v495, %v487
    %v552 = vpack.c.b16 %v496, %v488
    %v553 = vpack.c.b16 %v497, %v489
    %v554 = vpack.c.b16 %v498, %v490
    %v555 = vpack.c.b16 %v507, %v499
    %v556 = vpack.c.b16 %v508, %v500
    %v557 = vpack.c.b16 %v509, %v501
    %v558 = vpack.c.b16 %v510, %v502
    %v559 = vpack.c.b16 %v511, %v503
    %v560 = vpack.c.b16 %v512, %v504
    %v561 = vpack.c.b16 %v513, %v505
    %v562 = vpack.c.b16 %v514, %v506
    %v563 = vpack.c.b16 %v523, %v515
    %v564 = vpack.c.b16 %v524, %v516
    %v565 = vpack.c.b16 %v525, %v517
    %v566 = vpack.c.b16 %v526, %v518
    %v567 = vpack.c.b16 %v527, %v519
    %v568 = vpack.c.b16 %v528, %v520
    %v569 = vpack.c.b16 %v529, %v521
    %v570 = vpack.c.b16 %v530, %v522
    %v571 = vpack.c.b16 %v539, %v531
    %v572 = vpack.c.b16 %v540, %v532
    %v573 = vpack.c.b16 %v541, %v533
    %v574 = vpack.c.b16 %v542, %v534
    %v575 = vpack.c.b16 %v543, %v535
    %v576 = vpack.c.b16 %v544, %v536
    %v577 = vpack.c.b16 %v545, %v537
    %v578 = vpack.c.b16 %v546, %v538
    %v739 = vunpack.c.l.b16 %v312
    %v740 = vunpack.c.h.b16 %v312
    %v741 = vunpack.c.l.b16 %v313
    %v742 = vunpack.c.h.b16 %v313
    %v743 = vunpack.c.l.b16 %v314
    %v744 = vunpack.c.h.b16 %v314
    %v745 = vunpack.c.l.b16 %v315
    %v746 = vunpack.c.h.b16 %v315
    %v747 = vunpack.c.l.b16 %v316
    %v748 = vunpack.c.h.b16 %v316
    %v749 = vunpack.c.l.b16 %v317
    %v750 = vunpack.c.h.b16 %v317
    %v751 = vunpack.c.l.b16 %v318
    %v752 = vunpack.c.h.b16 %v318
    %v753 = vunpack.c.l.b16 %v319
    %v754 = vunpack.c.h.b16 %v319
    %v755 = vunpack.c.l.b16 %v320
    %v756 = vunpack.c.h.b16 %v320
    %v757 = vunpack.c.l.b16 %v321
    %v758 = vunpack.c.h.b16 %v321
    %v759 = vunpack.c.l.b16 %v322
    %v760 = vunpack.c.h.b16 %v322
    %v761 = vunpack.c.l.b16 %v323
    %v762 = vunpack.c.h.b16 %v323
    %v763 = vunpack.c.l.b16 %v324
    %v764 = vunpack.c.h.b16 %v324
    %v765 = vunpack.c.l.b16 %v325
    %v766 = vunpack.c.h.b16 %v325
    %v767 = vunpack.c.l.b16 %v326
    %v768 = vunpack.c.h.b16 %v326
    %v769 = vunpack.c.l.b16 %v327
    %v770 = vunpack.c.h.b16 %v327
    %v771 = vunpack.c.l.b16 %v328
    %v772 = vunpack.c.h.b16 %v328
    %v773 = vunpack.c.l.b16 %v329
    %v774 = vunpack.c.h.b16 %v329
    %v775 = vunpack.c.l.b16 %v330
    %v776 = vunpack.c.h.b16 %v330
    %v777 = vunpack.c.l.b16 %v331
    %v778 = vunpack.c.h.b16 %v331
    %v779 = vunpack.c.l.b16 %v332
    %v780 = vunpack.c.h.b16 %v332
    %v781 = vunpack.c.l.b16 %v333
    %v782 = vunpack.c.h.b16 %v333
    %v783 = vunpack.c.l.b16 %v334
    %v784 = vunpack.c.h.b16 %v334
    %v785 = vunpack.c.l.b16 %v335
    %v786 = vunpack.c.h.b16 %v335
    %v787 = vunpack.c.l.b16 %v336
    %v788 = vunpack.c.h.b16 %v336
    %v789 = vunpack.c.l.b16 %v337
    %v790 = vunpack.c.h.b16 %v337
    %v791 = vunpack.c.l.b16 %v338
    %v792 = vunpack.c.h.b16 %v338
    %v793 = vunpack.c.l.b16 %v339
    %v794 = vunpack.c.h.b16 %v339
    %v795 = vunpack.c.l.b16 %v340
    %v796 = vunpack.c.h.b16 %v340
    %v797 = vunpack.c.l.b16 %v341
    %v798 = vunpack.c.h.b16 %v341
    %v799 = vunpack.c.l.b16 %v342
    %v800 = vunpack.c.h.b16 %v342
    %v801 = vunpack.c.l.b16 %v343
    %v802 = vunpack.c.h.b16 %v343
    %v803 = vunpack.c.l.b16 %v344
    %v804 = vunpack.c.h.b16 %v344
    %v805 = vunpack.c.l.b16 %v345
    %v806 = vunpack.c.h.b16 %v345
    %v807 = vunpack.c.l.b16 %v346
    %v808 = vunpack.c.h.b16 %v346
    %v809 = vunpack.c.l.b16 %v347
    %v810 = vunpack.c.h.b16 %v347
    %v811 = vunpack.c.l.b16 %v348
    %v812 = vunpack.c.h.b16 %v348
    %v813 = vunpack.c.l.b16 %v349
    %v814 = vunpack.c.h.b16 %v349
    %v815 = vunpack.c.l.b16 %v350
    %v816 = vunpack.c.h.b16 %v350
    %v817 = vunpack.c.l.b16 %v351
    %v818 = vunpack.c.h.b16 %v351
    %v819 = vunpack.c.l.b16 %v352
    %v820 = vunpack.c.h.b16 %v352
    %v821 = vunpack.c.l.b16 %v353
    %v822 = vunpack.c.h.b16 %v353
    %v823 = vunpack.c.l.b16 %v354
    %v824 = vunpack.c.h.b16 %v354
    %v825 = vunpack.c.l.b16 %v355
    %v826 = vunpack.c.h.b16 %v355
    %v827 = vunpack.c.l.b16 %v356
    %v828 = vunpack.c.h.b16 %v356
    %v829 = vunpack.c.l.b16 %v357
    %v830 = vunpack.c.h.b16 %v357
    %v831 = vunpack.c.l.b16 %v358
    %v832 = vunpack.c.h.b16 %v358
    %v833 = vunpack.c.l.b16 %v359
    %v834 = vunpack.c.h.b16 %v359
    %v835 = vunpack.c.l.b16 %v360
    %v836 = vunpack.c.h.b16 %v360
    %v837 = vunpack.c.l.b16 %v361
    %v838 = vunpack.c.h.b16 %v361
    %v839 = vunpack.c.l.b16 %v362
    %v840 = vunpack.c.h.b16 %v362
    %v841 = vunpack.c.l.b16 %v363
    %v842 = vunpack.c.h.b16 %v363
    %v843 = vunpack.c.l.b16 %v364
    %v844 = vunpack.c.h.b16 %v364
    %v845 = vunpack.c.l.b16 %v365
    %v846 = vunpack.c.h.b16 %v365
    %v847 = vunpack.c.l.b16 %v366
    %v848 = vunpack.c.h.b16 %v366
    %v849 = vunpack.c.l.b16 %v367
    %v850 = vunpack.c.h.b16 %v367
    %v851 = vunpack.c.l.b16 %v368
    %v852 = vunpack.c.h.b16 %v368
    %v853 = vunpack.c.l.b16 %v369
    %v854 = vunpack.c.h.b16 %v369
    %v855 = vunpack.c.l.b16 %v370
    %v856 = vunpack.c.h.b16 %v370
    %v857 = vunpack.c.l.b16 %v371
    %v858 = vunpack.c.h.b16 %v371
    %v859 = vunpack.c.l.b16 %v372
    %v860 = vunpack.c.h.b16 %v372
    %v861 = vunpack.c.l.b16 %v373
    %v862 = vunpack.c.h.b16 %v373
    %v863 = vunpack.c.l.b16 %v374
    %v864 = vunpack.c.h.b16 %v374
    %v865 = vunpack.c.l.b16 %v375
    %v866 = vunpack.c.h.b16 %v375
    %v867 = vunpack.c.l.b16 %v376
    %v868 = vunpack.c.h.b16 %v376
    %v869 = vunpack.c.l.b16 %v377
    %v870 = vunpack.c.h.b16 %v377
    %v871 = vunpack.c.l.b16 %v378
    %v872 = vunpack.c.h.b16 %v378
    %v873 = vunpack.c.l.b16 %v379
    %v874 = vunpack.c.h.b16 %v379
    %v875 = vunpack.c.l.b16 %v380
    %v876 = vunpack.c.h.b16 %v380
    %v877 = vunpack.c.l.b16 %v381
    %v878 = vunpack.c.h.b16 %v381
    %v879 = vunpack.c.l.b16 %v382
    %v880 = vunpack.c.h.b16 %v382
    %v881 = vunpack.c.l.b16 %v383
    %v882 = vunpack.c.h.b16 %v383
    %v883 = vunpack.c.l.b16 %v384
    %v884 = vunpack.c.h.b16 %v384
    %v885 = vunpack.c.l.b16 %v385
    %v886 = vunpack.c.h.b16 %v385
    %v887 = vunpack.c.l.b16 %v386
    %v888 = vunpack.c.h.b16 %v386
    %v889 = vunpack.c.l.b16 %v387
    %v890 = vunpack.c.h.b16 %v387
    %v891 = vunpack.c.l.b16 %v388
    %v892 = vunpack.c.h.b16 %v388
    %v893 = vunpack.c.l.b16 %v389
    %v894 = vunpack.c.h.b16 %v389
    %v895 = vunpack.c.l.b16 %v390
    %v896 = vunpack.c.h.b16 %v390
    %v897 = vunpack.c.l.b16 %v391
    %v898 = vunpack.c.h.b16 %v391
    %v899 = vunpack.c.l.b16 %v392
    %v900 = vunpack.c.h.b16 %v392
    %v901 = vunpack.c.l.b16 %v393
    %v902 = vunpack.c.h.b16 %v393
    %v903 = vunpack.c.l.b16 %v394
    %v904 = vunpack.c.h.b16 %v394
    %v905 = vunpack.c.l.b16 %v395
    %v906 = vunpack.c.h.b16 %v395
    %v907 = vunpack.c.l.b16 %v396
    %v908 = vunpack.c.h.b16 %v396
    %v909 = vunpack.c.l.b16 %v397
    %v910 = vunpack.c.h.b16 %v397
    %v911 = vunpack.c.l.b16 %v398
    %v912 = vunpack.c.h.b16 %v398
    %v913 = vunpack.c.l.b16 %v399
    %v914 = vunpack.c.h.b16 %v399
    %v915 = vunpack.c.l.b16 %v400
    %v916 = vunpack.c.h.b16 %v400
    %v917 = vunpack.c.l.b16 %v401
    %v918 = vunpack.c.h.b16 %v401
    %v919 = vunpack.c.l.b16 %v402
    %v920 = vunpack.c.h.b16 %v402
    %v921 = vunpack.c.l.b16 %v403
    %v922 = vunpack.c.h.b16 %v403
    %v923 = vunpack.c.l.b16 %v404
    %v924 = vunpack.c.h.b16 %v404
    %v925 = vunpack.c.l.b16 %v405
    %v926 = vunpack.c.h.b16 %v405
    %v927 = vunpack.c.l.b16 %v406
    %v928 = vunpack.c.h.b16 %v406
    %v929 = vunpack.c.l.b16 %v407
    %v930 = vunpack.c.h.b16 %v407
    %v931 = vunpack.c.l.b16 %v408
    %v932 = vunpack.c.h.b16 %v408
    %v933 = vunpack.c.l.b16 %v409
    %v934 = vunpack.c.h.b16 %v409
    %v935 = vunpack.c.l.b16 %v410
    %v936 = vunpack.c.h.b16 %v410
    %v937 = vunpack.c.l.b16 %v411
    %v938 = vunpack.c.h.b16 %v411
    %v939 = vunpack.c.l.b16 %v412
    %v940 = vunpack.c.h.b16 %v412
    %v941 = vunpack.c.l.b16 %v413
    %v942 = vunpack.c.h.b16 %v413
    %v943 = vunpack.c.l.b16 %v414
    %v944 = vunpack.c.h.b16 %v414
    %v945 = vunpack.c.l.b16 %v415
    %v946 = vunpack.c.h.b16 %v415
    %v947 = vunpack.c.l.b16 %v416
    %v948 = vunpack.c.h.b16 %v416
    %v949 = vunpack.c.l.b16 %v417
    %v950 = vunpack.c.h.b16 %v417
    %v951 = vunpack.c.l.b16 %v418
    %v952 = vunpack.c.h.b16 %v418
    %v953 = vunpack.c.l.b16 %v419
    %v954 = vunpack.c.h.b16 %v419
    %v955 = vunpack.c.l.b16 %v420
    %v956 = vunpack.c.h.b16 %v420
    %v957 = vunpack.c.l.b16 %v421
    %v958 = vunpack.c.h.b16 %v421
    %v959 = vunpack.c.l.b16 %v422
    %v960 = vunpack.c.h.b16 %v422
    %v961 = vunpack.c.l.b16 %v423
    %v962 = vunpack.c.h.b16 %v423
    %v963 = vunpack.c.l.b16 %v424
    %v964 = vunpack.c.h.b16 %v424
    %v965 = vunpack.c.l.b16 %v425
    %v966 = vunpack.c.h.b16 %v425
    %v967 = vunpack.c.l.b16 %v426
    %v968 = vunpack.c.h.b16 %v426
    %v969 = vunpack.c.l.b16 %v427
    %v970 = vunpack.c.h.b16 %v427
    %v971 = vunpack.c.l.b16 %v428
    %v972 = vunpack.c.h.b16 %v428
    %v973 = vunpack.c.l.b16 %v429
    %v974 = vunpack.c.h.b16 %v429
    %v975 = vunpack.c.l.b16 %v430
    %v976 = vunpack.c.h.b16 %v430
    %v977 = vunpack.c.l.b16 %v431
    %v978 = vunpack.c.h.b16 %v431
    %v979 = vunpack.c.l.b16 %v432
    %v980 = vunpack.c.h.b16 %v432
    %v981 = vunpack.c.l.b16 %v433
    %v982 = vunpack.c.h.b16 %v433
    %v983 = vunpack.c.l.b16 %v434
    %v984 = vunpack.c.h.b16 %v434
    %v985 = vunpack.c.l.b16 %v435
    %v986 = vunpack.c.h.b16 %v435
    %v987 = vunpack.c.l.b16 %v436
    %v988 = vunpack.c.h.b16 %v436
    %v989 = vunpack.c.l.b16 %v437
    %v990 = vunpack.c.h.b16 %v437
    %v991 = vunpack.c.l.b16 %v438
    %v992 = vunpack.c.h.b16 %v438
    %v993 = vunpack.c.l.b16 %v439
    %v994 = vunpack.c.h.b16 %v439
    %v995 = vpack.c.b16 %v741, %v739
    %v996 = vpack.c.b16 %v742, %v740
    %v997 = vpack.c.b16 %v745, %v743
    %v998 = vpack.c.b16 %v746, %v744
    %v999 = vpack.c.b16 %v749, %v747
    %v1000 = vpack.c.b16 %v750, %v748
    %v1001 = vpack.c.b16 %v753, %v751
    %v1002 = vpack.c.b16 %v754, %v752
    %v1003 = vpack.c.b16 %v757, %v755
    %v1004 = vpack.c.b16 %v758, %v756
    %v1005 = vpack.c.b16 %v761, %v759
    %v1006 = vpack.c.b16 %v762, %v760
    %v1007 = vpack.c.b16 %v765, %v763
    %v1008 = vpack.c.b16 %v766, %v764
    %v1009 = vpack.c.b16 %v769, %v767
    %v1010 = vpack.c.b16 %v770, %v768
    %v1011 = vpack.c.b16 %v773, %v771
    %v1012 = vpack.c.b16 %v774, %v772
    %v1013 = vpack.c.b16 %v777, %v775
    %v1014 = vpack.c.b16 %v778, %v776
    %v1015 = vpack.c.b16 %v781, %v779
    %v1016 = vpack.c.b16 %v782, %v780
    %v1017 = vpack.c.b16 %v785, %v783
    %v1018 = vpack.c.b16 %v786, %v784
    %v1019 = vpack.c.b16 %v789, %v787
    %v1020 = vpack.c.b16 %v790, %v788
    %v1021 = vpack.c.b16 %v793, %v791
    %v1022 = vpack.c.b16 %v794, %v792
    %v1023 = vpack.c.b16 %v797, %v795
    %v1024 = vpack.c.b16 %v798, %v796
    %v1025 = vpack.c.b16 %v801, %v799
    %v1026 = vpack.c.b16 %v802, %v800
    %v1027 = vpack.c.b16 %v805, %v803
    %v1028 = vpack.c.b16 %v806, %v804
    %v1029 = vpack.c.b16 %v809, %v807
    %v1030 = vpack.c.b16 %v810, %v808
    %v1031 = vpack.c.b16 %v813, %v811
    %v1032 = vpack.c.b16 %v814, %v812
    %v1033 = vpack.c.b16 %v817, %v815
    %v1034 = vpack.c.b16 %v818, %v816
    %v1035 = vpack.c.b16 %v821, %v819
    %v1036 = vpack.c.b16 %v822, %v820
    %v1037 = vpack.c.b16 %v825, %v823
    %v1038 = vpack.c.b16 %v826, %v824
    %v1039 = vpack.c.b16 %v829, %v827
    %v1040 = vpack.c.b16 %v830, %v828
    %v1041 = vpack.c.b16 %v833, %v831
    %v1042 = vpack.c.b16 %v834, %v832
    %v1043 = vpack.c.b16 %v837, %v835
    %v1044 = vpack.c.b16 %v838, %v836
    %v1045 = vpack.c.b16 %v841, %v839
    %v1046 = vpack.c.b16 %v842, %v840
    %v1047 = vpack.c.b16 %v845, %v843
    %v1048 = vpack.c.b16 %v846, %v844
    %v1049 = vpack.c.b16 %v849, %v847
    %v1050 = vpack.c.b16 %v850, %v848
    %v1051 = vpack.c.b16 %v853, %v851
    %v1052 = vpack.c.b16 %v854, %v852
    %v1053 = vpack.c.b16 %v857, %v855
    %v1054 = vpack.c.b16 %v858, %v856
    %v1055 = vpack.c.b16 %v861, %v859
    %v1056 = vpack.c.b16 %v862, %v860
    %v1057 = vpack.c.b16 %v865, %v863
    %v1058 = vpack.c.b16 %v866, %v864
    %v1059 = vpack.c.b16 %v869, %v867
    %v1060 = vpack.c.b16 %v870, %v868
    %v1061 = vpack.c.b16 %v873, %v871
    %v1062 = vpack.c.b16 %v874, %v872
    %v1063 = vpack.c.b16 %v877, %v875
    %v1064 = vpack.c.b16 %v878, %v876
    %v1065 = vpack.c.b16 %v881, %v879
    %v1066 = vpack.c.b16 %v882, %v880
    %v1067 = vpack.c.b16 %v885, %v883
    %v1068 = vpack.c.b16 %v886, %v884
    %v1069 = vpack.c.b16 %v889, %v887
    %v1070 = vpack.c.b16 %v890, %v888
    %v1071 = vpack.c.b16 %v893, %v891
    %v1072 = vpack.c.b16 %v894, %v892
    %v1073 = vpack.c.b16 %v897, %v895
    %v1074 = vpack.c.b16 %v898, %v896
    %v1075 = vpack.c.b16 %v901, %v899
    %v1076 = vpack.c.b16 %v902, %v900
    %v1077 = vpack.c.b16 %v905, %v903
    %v1078 = vpack.c.b16 %v906, %v904
    %v1079 = vpack.c.b16 %v909, %v907
    %v1080 = vpack.c.b16 %v910, %v908
    %v1081 = vpack.c.b16 %v913, %v911
    %v1082 = vpack.c.b16 %v914, %v912
    %v1083 = vpack.c.b16 %v917, %v915
    %v1084 = vpack.c.b16 %v918, %v916
    %v1085 = vpack.c.b16 %v921, %v919
    %v1086 = vpack.c.b16 %v922, %v920
    %v1087 = vpack.c.b16 %v925, %v923
    %v1088 = vpack.c.b16 %v926, %v924
    %v1089 = vpack.c.b16 %v929, %v927
    %v1090 = vpack.c.b16 %v930, %v928
    %v1091 = vpack.c.b16 %v933, %v931
    %v1092 = vpack.c.b16 %v934, %v932
    %v1093 = vpack.c.b16 %v937, %v935
    %v1094 = vpack.c.b16 %v938, %v936
    %v1095 = vpack.c.b16 %v941, %v939
    %v1096 = vpack.c.b16 %v942, %v940
    %v1097 = vpack.c.b16 %v945, %v943
    %v1098 = vpack.c.b16 %v946, %v944
    %v1099 = vpack.c.b16 %v949, %v947
    %v1100 = vpack.c.b16 %v950, %v948
    %v1101 = vpack.c.b16 %v953, %v951
    %v1102 = vpack.c.b16 %v954, %v952
    %v1103 = vpack.c.b16 %v957, %v955
    %v1104 = vpack.c.b16 %v958, %v956
    %v1105 = vpack.c.b16 %v961, %v959
    %v1106 = vpack.c.b16 %v962, %v960
    %v1107 = vpack.c.b16 %v965, %v963
    %v1108 = vpack.c.b16 %v966, %v964
    %v1109 = vpack.c.b16 %v969, %v967
    %v1110 = vpack.c.b16 %v970, %v968
    %v1111 = vpack.c.b16 %v973, %v971
    %v1112 = vpack.c.b16 %v974, %v972
    %v1113 = vpack.c.b16 %v977, %v975
    %v1114 = vpack.c.b16 %v978, %v976
    %v1115 = vpack.c.b16 %v981, %v979
    %v1116 = vpack.c.b16 %v982, %v980
    %v1117 = vpack.c.b16 %v985, %v983
    %v1118 = vpack.c.b16 %v986, %v984
    %v1119 = vpack.c.b16 %v989, %v987
    %v1120 = vpack.c.b16 %v990, %v988
    %v1121 = vpack.c.b16 %v993, %v991
    %v1122 = vpack.c.b16 %v994, %v992
    %1251 = vmatprep.subr.bf16.mxu0 %v996
    %1252 = vmatpush1.bf16.msra.mxu0 %v995
    %1253 = vmatprep.subr.bf16.mxu0 %v998
    %1254 = vmatpush1.bf16.msra.mxu0 %v997
    %1255 = vmatprep.subr.bf16.mxu0 %v1000
    %1256 = vmatpush1.bf16.msra.mxu0 %v999
    %1257 = vmatprep.subr.bf16.mxu0 %v1002
    %1258 = vmatpush1.bf16.msra.mxu0 %v1001
    %1259 = vmatprep.subr.bf16.mxu0 %v1004
    %1260 = vmatpush1.bf16.msra.mxu0 %v1003
    %1261 = vmatprep.subr.bf16.mxu0 %v1006
    %1262 = vmatpush1.bf16.msra.mxu0 %v1005
    %1263 = vmatprep.subr.bf16.mxu0 %v1008
    %1264 = vmatpush1.bf16.msra.mxu0 %v1007
    %1265 = vmatprep.subr.bf16.mxu0 %v1010
    %1266 = vmatpush1.bf16.msra.mxu0 %v1009
    %1267 = vmatprep.subr.bf16.mxu0 %v1012
    %1268 = vmatpush1.bf16.msra.mxu0 %v1011
    %1269 = vmatprep.subr.bf16.mxu0 %v1014
    %1270 = vmatpush1.bf16.msra.mxu0 %v1013
    %1271 = vmatprep.subr.bf16.mxu0 %v1016
    %1272 = vmatpush1.bf16.msra.mxu0 %v1015
    %1273 = vmatprep.subr.bf16.mxu0 %v1018
    %1274 = vmatpush1.bf16.msra.mxu0 %v1017
    %1275 = vmatprep.subr.bf16.mxu0 %v1020
    %1276 = vmatpush1.bf16.msra.mxu0 %v1019
    %1277 = vmatprep.subr.bf16.mxu0 %v1022
    %1278 = vmatpush1.bf16.msra.mxu0 %v1021
    %1279 = vmatprep.subr.bf16.mxu0 %v1024
    %1280 = vmatpush1.bf16.msra.mxu0 %v1023
    %1281 = vmatprep.subr.bf16.mxu0 %v1026
    %1282 = vmatpush1.bf16.msra.mxu0 %v1025
    %1283 = vmatprep.mubr.bf16.mxu0 %v548
    %1284 = vmatmul.mubr.bf16.gmra.mrb[0].mxu0 %v547
    %v1285 = vpop.f32.mrb[0].mxu0
    %v1286 = vadd.f32 %v444, %v1285
    %v1287 = vpop.f32.mrb[0].mxu0
    %v1288 = vadd.f32 %v448, %v1287
    %v1289 = vpop.f32.mrb[0].mxu0
    %v1290 = vadd.f32 %v444, %v1289
    %v1291 = vpop.f32.mrb[0].mxu0
    %v1292 = vadd.f32 %v448, %v1291
    %1293 = vmatprep.mubr.bf16.mxu0 %v556
    %1294 = vmatmul.mubr.bf16.gmra.mrb[0].mxu0 %v555
    %v1295 = vpop.f32.mrb[0].mxu0
    %v1296 = vadd.f32 %v444, %v1295
    %v1297 = vpop.f32.mrb[0].mxu0
    %v1298 = vadd.f32 %v448, %v1297
    %v1299 = vpop.f32.mrb[0].mxu0
    %v1300 = vadd.f32 %v444, %v1299
    %v1301 = vpop.f32.mrb[0].mxu0
    %v1302 = vadd.f32 %v448, %v1301
    %1303 = vmatprep.mubr.bf16.mxu0 %v564
    %1304 = vmatmul.mubr.bf16.gmra.mrb[0].mxu0 %v563
    %v1305 = vpop.f32.mrb[0].mxu0
    %v1306 = vadd.f32 %v444, %v1305
    %v1307 = vpop.f32.mrb[0].mxu0
    %v1308 = vadd.f32 %v448, %v1307
    %v1309 = vpop.f32.mrb[0].mxu0
    %v1310 = vadd.f32 %v444, %v1309
    %v1311 = vpop.f32.mrb[0].mxu0
    %v1312 = vadd.f32 %v448, %v1311
    %1313 = vmatprep.mubr.bf16.mxu0 %v572
    %1314 = vmatmul.mubr.bf16.gmra.mrb[0].mxu0 %v571
    %v1315 = vpop.f32.mrb[0].mxu0
    %v1316 = vadd.f32 %v444, %v1315
    %v1317 = vpop.f32.mrb[0].mxu0
    %v1318 = vadd.f32 %v448, %v1317
    %v1319 = vpop.f32.mrb[0].mxu0
    %v1320 = vadd.f32 %v444, %v1319
    %v1321 = vpop.f32.mrb[0].mxu0
    %v1322 = vadd.f32 %v448, %v1321
    %1323 = vdwg.mxu0
    %1324 = vmatprep.subr.bf16.mxu0 %v1028
    %1325 = vmatpush1.bf16.msra.mxu0 %v1027
    %1326 = vmatprep.subr.bf16.mxu0 %v1030
    %1327 = vmatpush1.bf16.msra.mxu0 %v1029
    %1328 = vmatprep.subr.bf16.mxu0 %v1032
    %1329 = vmatpush1.bf16.msra.mxu0 %v1031
    %1330 = vmatprep.subr.bf16.mxu0 %v1034
    %1331 = vmatpush1.bf16.msra.mxu0 %v1033
    %1332 = vmatprep.subr.bf16.mxu0 %v1036
    %1333 = vmatpush1.bf16.msra.mxu0 %v1035
    %1334 = vmatprep.subr.bf16.mxu0 %v1038
    %1335 = vmatpush1.bf16.msra.mxu0 %v1037
    %1336 = vmatprep.subr.bf16.mxu0 %v1040
    %1337 = vmatpush1.bf16.msra.mxu0 %v1039
    %1338 = vmatprep.subr.bf16.mxu0 %v1042
    %1339 = vmatpush1.bf16.msra.mxu0 %v1041
    %1340 = vmatprep.subr.bf16.mxu0 %v1044
    %1341 = vmatpush1.bf16.msra.mxu0 %v1043
    %1342 = vmatprep.subr.bf16.mxu0 %v1046
    %1343 = vmatpush1.bf16.msra.mxu0 %v1045
    %1344 = vmatprep.subr.bf16.mxu0 %v1048
    %1345 = vmatpush1.bf16.msra.mxu0 %v1047
    %1346 = vmatprep.subr.bf16.mxu0 %v1050
    %1347 = vmatpush1.bf16.msra.mxu0 %v1049
    %1348 = vmatprep.subr.bf16.mxu0 %v1052
    %1349 = vmatpush1.bf16.msra.mxu0 %v1051
    %1350 = vmatprep.subr.bf16.mxu0 %v1054
    %1351 = vmatpush1.bf16.msra.mxu0 %v1053
    %1352 = vmatprep.subr.bf16.mxu0 %v1056
    %1353 = vmatpush1.bf16.msra.mxu0 %v1055
    %1354 = vmatprep.subr.bf16.mxu0 %v1058
    %1355 = vmatpush1.bf16.msra.mxu0 %v1057
    %1356 = vmatprep.mubr.bf16.mxu0 %v550
    %1357 = vmatmul.mubr.bf16.gmra.mrb[0].mxu0 %v549
    %v1358 = vpop.f32.mrb[0].mxu0
    %v1359 = vadd.f32 %v1286, %v1358
    %v1360 = vpop.f32.mrb[0].mxu0
    %v1361 = vadd.f32 %v1288, %v1360
    %v1362 = vpop.f32.mrb[0].mxu0
    %v1363 = vadd.f32 %v1290, %v1362
    %v1364 = vpop.f32.mrb[0].mxu0
    %v1365 = vadd.f32 %v1292, %v1364
    %1366 = vmatprep.mubr.bf16.mxu0 %v558
    %1367 = vmatmul.mubr.bf16.gmra.mrb[0].mxu0 %v557
    %v1368 = vpop.f32.mrb[0].mxu0
    %v1369 = vadd.f32 %v1296, %v1368
    %v1370 = vpop.f32.mrb[0].mxu0
    %v1371 = vadd.f32 %v1298, %v1370
    %v1372 = vpop.f32.mrb[0].mxu0
    %v1373 = vadd.f32 %v1300, %v1372
    %v1374 = vpop.f32.mrb[0].mxu0
    %v1375 = vadd.f32 %v1302, %v1374
    %1376 = vmatprep.mubr.bf16.mxu0 %v566
    %1377 = vmatmul.mubr.bf16.gmra.mrb[0].mxu0 %v565
    %v1378 = vpop.f32.mrb[0].mxu0
    %v1379 = vadd.f32 %v1306, %v1378
    %v1380 = vpop.f32.mrb[0].mxu0
    %v1381 = vadd.f32 %v1308, %v1380
    %v1382 = vpop.f32.mrb[0].mxu0
    %v1383 = vadd.f32 %v1310, %v1382
    %v1384 = vpop.f32.mrb[0].mxu0
    %v1385 = vadd.f32 %v1312, %v1384
    %1386 = vmatprep.mubr.bf16.mxu0 %v574
    %1387 = vmatmul.mubr.bf16.gmra.mrb[0].mxu0 %v573
    %v1388 = vpop.f32.mrb[0].mxu0
    %v1389 = vadd.f32 %v1316, %v1388
    %v1390 = vpop.f32.mrb[0].mxu0
    %v1391 = vadd.f32 %v1318, %v1390
    %v1392 = vpop.f32.mrb[0].mxu0
    %v1393 = vadd.f32 %v1320, %v1392
    %v1394 = vpop.f32.mrb[0].mxu0
    %v1395 = vadd.f32 %v1322, %v1394
    %1396 = vdwg.mxu0
    %1397 = vmatprep.subr.bf16.mxu0 %v1060
    %1398 = vmatpush1.bf16.msra.mxu0 %v1059
    %1399 = vmatprep.subr.bf16.mxu0 %v1062
    %1400 = vmatpush1.bf16.msra.mxu0 %v1061
    %1401 = vmatprep.subr.bf16.mxu0 %v1064
    %1402 = vmatpush1.bf16.msra.mxu0 %v1063
    %1403 = vmatprep.subr.bf16.mxu0 %v1066
    %1404 = vmatpush1.bf16.msra.mxu0 %v1065
    %1405 = vmatprep.subr.bf16.mxu0 %v1068
    %1406 = vmatpush1.bf16.msra.mxu0 %v1067
    %1407 = vmatprep.subr.bf16.mxu0 %v1070
    %1408 = vmatpush1.bf16.msra.mxu0 %v1069
    %1409 = vmatprep.subr.bf16.mxu0 %v1072
    %1410 = vmatpush1.bf16.msra.mxu0 %v1071
    %1411 = vmatprep.subr.bf16.mxu0 %v1074
    %1412 = vmatpush1.bf16.msra.mxu0 %v1073
    %1413 = vmatprep.subr.bf16.mxu0 %v1076
    %1414 = vmatpush1.bf16.msra.mxu0 %v1075
    %1415 = vmatprep.subr.bf16.mxu0 %v1078
    %1416 = vmatpush1.bf16.msra.mxu0 %v1077
    %1417 = vmatprep.subr.bf16.mxu0 %v1080
    %1418 = vmatpush1.bf16.msra.mxu0 %v1079
    %1419 = vmatprep.subr.bf16.mxu0 %v1082
    %1420 = vmatpush1.bf16.msra.mxu0 %v1081
    %1421 = vmatprep.subr.bf16.mxu0 %v1084
    %1422 = vmatpush1.bf16.msra.mxu0 %v1083
    %1423 = vmatprep.subr.bf16.mxu0 %v1086
    %1424 = vmatpush1.bf16.msra.mxu0 %v1085
    %1425 = vmatprep.subr.bf16.mxu0 %v1088
    %1426 = vmatpush1.bf16.msra.mxu0 %v1087
    %1427 = vmatprep.subr.bf16.mxu0 %v1090
    %1428 = vmatpush1.bf16.msra.mxu0 %v1089
    %1429 = vmatprep.mubr.bf16.mxu0 %v552
    %1430 = vmatmul.mubr.bf16.gmra.mrb[0].mxu0 %v551
    %v1431 = vpop.f32.mrb[0].mxu0
    %v1432 = vadd.f32 %v1359, %v1431
    %v1433 = vpop.f32.mrb[0].mxu0
    %v1434 = vadd.f32 %v1361, %v1433
    %v1435 = vpop.f32.mrb[0].mxu0
    %v1436 = vadd.f32 %v1363, %v1435
    %v1437 = vpop.f32.mrb[0].mxu0
    %v1438 = vadd.f32 %v1365, %v1437
    %1439 = vmatprep.mubr.bf16.mxu0 %v560
    %1440 = vmatmul.mubr.bf16.gmra.mrb[0].mxu0 %v559
    %v1441 = vpop.f32.mrb[0].mxu0
    %v1442 = vadd.f32 %v1369, %v1441
    %v1443 = vpop.f32.mrb[0].mxu0
    %v1444 = vadd.f32 %v1371, %v1443
    %v1445 = vpop.f32.mrb[0].mxu0
    %v1446 = vadd.f32 %v1373, %v1445
    %v1447 = vpop.f32.mrb[0].mxu0
    %v1448 = vadd.f32 %v1375, %v1447
    %1449 = vmatprep.mubr.bf16.mxu0 %v568
    %1450 = vmatmul.mubr.bf16.gmra.mrb[0].mxu0 %v567
    %v1451 = vpop.f32.mrb[0].mxu0
    %v1452 = vadd.f32 %v1379, %v1451
    %v1453 = vpop.f32.mrb[0].mxu0
    %v1454 = vadd.f32 %v1381, %v1453
    %v1455 = vpop.f32.mrb[0].mxu0
    %v1456 = vadd.f32 %v1383, %v1455
    %v1457 = vpop.f32.mrb[0].mxu0
    %v1458 = vadd.f32 %v1385, %v1457
    %1459 = vmatprep.mubr.bf16.mxu0 %v576
    %1460 = vmatmul.mubr.bf16.gmra.mrb[0].mxu0 %v575
    %v1461 = vpop.f32.mrb[0].mxu0
    %v1462 = vadd.f32 %v1389, %v1461
    %v1463 = vpop.f32.mrb[0].mxu0
    %v1464 = vadd.f32 %v1391, %v1463
    %v1465 = vpop.f32.mrb[0].mxu0
    %v1466 = vadd.f32 %v1393, %v1465
    %v1467 = vpop.f32.mrb[0].mxu0
    %v1468 = vadd.f32 %v1395, %v1467
    %1469 = vdwg.mxu0
    %1470 = vmatprep.subr.bf16.mxu0 %v1092
    %1471 = vmatpush1.bf16.msra.mxu0 %v1091
    %1472 = vmatprep.subr.bf16.mxu0 %v1094
    %1473 = vmatpush1.bf16.msra.mxu0 %v1093
    %1474 = vmatprep.subr.bf16.mxu0 %v1096
    %1475 = vmatpush1.bf16.msra.mxu0 %v1095
    %1476 = vmatprep.subr.bf16.mxu0 %v1098
    %1477 = vmatpush1.bf16.msra.mxu0 %v1097
    %1478 = vmatprep.subr.bf16.mxu0 %v1100
    %1479 = vmatpush1.bf16.msra.mxu0 %v1099
    %1480 = vmatprep.subr.bf16.mxu0 %v1102
    %1481 = vmatpush1.bf16.msra.mxu0 %v1101
    %1482 = vmatprep.subr.bf16.mxu0 %v1104
    %1483 = vmatpush1.bf16.msra.mxu0 %v1103
    %1484 = vmatprep.subr.bf16.mxu0 %v1106
    %1485 = vmatpush1.bf16.msra.mxu0 %v1105
    %1486 = vmatprep.subr.bf16.mxu0 %v1108
    %1487 = vmatpush1.bf16.msra.mxu0 %v1107
    %1488 = vmatprep.subr.bf16.mxu0 %v1110
    %1489 = vmatpush1.bf16.msra.mxu0 %v1109
    %1490 = vmatprep.subr.bf16.mxu0 %v1112
    %1491 = vmatpush1.bf16.msra.mxu0 %v1111
    %1492 = vmatprep.subr.bf16.mxu0 %v1114
    %1493 = vmatpush1.bf16.msra.mxu0 %v1113
    %1494 = vmatprep.subr.bf16.mxu0 %v1116
    %1495 = vmatpush1.bf16.msra.mxu0 %v1115
    %1496 = vmatprep.subr.bf16.mxu0 %v1118
    %1497 = vmatpush1.bf16.msra.mxu0 %v1117
    %1498 = vmatprep.subr.bf16.mxu0 %v1120
    %1499 = vmatpush1.bf16.msra.mxu0 %v1119
    %1500 = vmatprep.subr.bf16.mxu0 %v1122
    %1501 = vmatpush1.bf16.msra.mxu0 %v1121
    %1502 = vmatprep.mubr.bf16.mxu0 %v554
    %1503 = vmatmul.mubr.bf16.gmra.mrb[0].mxu0 %v553
    %v1504 = vpop.f32.mrb[0].mxu0
    %v1505 = vadd.f32 %v1432, %v1504
    %v1506 = vpop.f32.mrb[0].mxu0
    %v1507 = vadd.f32 %v1434, %v1506
    %v1508 = vpop.f32.mrb[0].mxu0
    %v1509 = vadd.f32 %v1436, %v1508
    %v1510 = vpop.f32.mrb[0].mxu0
    %v1511 = vadd.f32 %v1438, %v1510
    %1512 = vmatprep.mubr.bf16.mxu0 %v562
    %1513 = vmatmul.mubr.bf16.gmra.mrb[0].mxu0 %v561
    %v1514 = vpop.f32.mrb[0].mxu0
    %v1515 = vadd.f32 %v1442, %v1514
    %v1516 = vpop.f32.mrb[0].mxu0
    %v1517 = vadd.f32 %v1444, %v1516
    %v1518 = vpop.f32.mrb[0].mxu0
    %v1519 = vadd.f32 %v1446, %v1518
    %v1520 = vpop.f32.mrb[0].mxu0
    %v1521 = vadd.f32 %v1448, %v1520
    %1522 = vmatprep.mubr.bf16.mxu0 %v570
    %1523 = vmatmul.mubr.bf16.gmra.mrb[0].mxu0 %v569
    %v1524 = vpop.f32.mrb[0].mxu0
    %v1525 = vadd.f32 %v1452, %v1524
    %v1526 = vpop.f32.mrb[0].mxu0
    %v1527 = vadd.f32 %v1454, %v1526
    %v1528 = vpop.f32.mrb[0].mxu0
    %v1529 = vadd.f32 %v1456, %v1528
    %v1530 = vpop.f32.mrb[0].mxu0
    %v1531 = vadd.f32 %v1458, %v1530
    %1532 = vmatprep.mubr.bf16.mxu0 %v578
    %1533 = vmatmul.mubr.bf16.gmra.mrb[0].mxu0 %v577
    %v1534 = vpop.f32.mrb[0].mxu0
    %v1535 = vadd.f32 %v1462, %v1534
    %v1536 = vpop.f32.mrb[0].mxu0
    %v1537 = vadd.f32 %v1464, %v1536
    %v1538 = vpop.f32.mrb[0].mxu0
    %v1539 = vadd.f32 %v1466, %v1538
    %v1540 = vpop.f32.mrb[0].mxu0
    %v1541 = vadd.f32 %v1468, %v1540
    %1542 = vdwg.mxu0
    %v1543 = vmul.f32 %v242, %v242
    %v1544 = vmul.f32 %v244, %v244
    %v1545 = vmul.f32 %v246, %v246
    %v1546 = vmul.f32 %v248, %v248
    %v1547 = vmul.f32 %v252, %v252
    %v1548 = vmul.f32 %v254, %v254
    %v1549 = vmul.f32 %v256, %v256
    %v1550 = vmul.f32 %v258, %v258
    %v1551 = vmul.f32 %v262, %v262
    %v1552 = vmul.f32 %v264, %v264
    %v1553 = vmul.f32 %v266, %v266
    %v1554 = vmul.f32 %v268, %v268
    %v1555 = vmul.f32 %v272, %v272
    %v1556 = vmul.f32 %v274, %v274
    %v1557 = vmul.f32 %v276, %v276
    %v1558 = vmul.f32 %v278, %v278
    %v1559 = vmul.f32 %v242, %v1543
    %v1560 = vmul.f32 %v244, %v1544
    %v1561 = vmul.f32 %v246, %v1545
    %v1562 = vmul.f32 %v248, %v1546
    %v1563 = vmul.f32 %v252, %v1547
    %v1564 = vmul.f32 %v254, %v1548
    %v1565 = vmul.f32 %v256, %v1549
    %v1566 = vmul.f32 %v258, %v1550
    %v1567 = vmul.f32 %v262, %v1551
    %v1568 = vmul.f32 %v264, %v1552
    %v1569 = vmul.f32 %v266, %v1553
    %v1570 = vmul.f32 %v268, %v1554
    %v1571 = vmul.f32 %v272, %v1555
    %v1572 = vmul.f32 %v274, %v1556
    %v1573 = vmul.f32 %v276, %v1557
    %v1574 = vmul.f32 %v278, %v1558
    %v1575 = vmul.f32 %v1559, 0.044715
    %v1576 = vmul.f32 %v1560, 0.044715
    %v1577 = vmul.f32 %v1561, 0.044715
    %v1578 = vmul.f32 %v1562, 0.044715
    %v1579 = vmul.f32 %v1563, 0.044715
    %v1580 = vmul.f32 %v1564, 0.044715
    %v1581 = vmul.f32 %v1565, 0.044715
    %v1582 = vmul.f32 %v1566, 0.044715
    %v1583 = vmul.f32 %v1567, 0.044715
    %v1584 = vmul.f32 %v1568, 0.044715
    %v1585 = vmul.f32 %v1569, 0.044715
    %v1586 = vmul.f32 %v1570, 0.044715
    %v1587 = vmul.f32 %v1571, 0.044715
    %v1588 = vmul.f32 %v1572, 0.044715
    %v1589 = vmul.f32 %v1573, 0.044715
    %v1590 = vmul.f32 %v1574, 0.044715
    %v1591 = vadd.f32 %v242, %v1575
    %v1592 = vadd.f32 %v244, %v1576
    %v1593 = vadd.f32 %v246, %v1577
    %v1594 = vadd.f32 %v248, %v1578
    %v1595 = vadd.f32 %v252, %v1579
    %v1596 = vadd.f32 %v254, %v1580
    %v1597 = vadd.f32 %v256, %v1581
    %v1598 = vadd.f32 %v258, %v1582
    %v1599 = vadd.f32 %v262, %v1583
    %v1600 = vadd.f32 %v264, %v1584
    %v1601 = vadd.f32 %v266, %v1585
    %v1602 = vadd.f32 %v268, %v1586
    %v1603 = vadd.f32 %v272, %v1587
    %v1604 = vadd.f32 %v274, %v1588
    %v1605 = vadd.f32 %v276, %v1589
    %v1606 = vadd.f32 %v278, %v1590
    %v1607 = vmul.f32 %v1591, 0.7978846
    %v1608 = vmul.f32 %v1592, 0.7978846
    %v1609 = vmul.f32 %v1593, 0.7978846
    %v1610 = vmul.f32 %v1594, 0.7978846
    %v1611 = vmul.f32 %v1595, 0.7978846
    %v1612 = vmul.f32 %v1596, 0.7978846
    %v1613 = vmul.f32 %v1597, 0.7978846
    %v1614 = vmul.f32 %v1598, 0.7978846
    %v1615 = vmul.f32 %v1599, 0.7978846
    %v1616 = vmul.f32 %v1600, 0.7978846
    %v1617 = vmul.f32 %v1601, 0.7978846
    %v1618 = vmul.f32 %v1602, 0.7978846
    %v1619 = vmul.f32 %v1603, 0.7978846
    %v1620 = vmul.f32 %v1604, 0.7978846
    %v1621 = vmul.f32 %v1605, 0.7978846
    %v1622 = vmul.f32 %v1606, 0.7978846
    %v1623 = vtanh.pop %v1607
    %v1624 = vtanh.pop %v1608
    %v1625 = vtanh.pop %v1609
    %v1626 = vtanh.pop %v1610
    %v1627 = vtanh.pop %v1611
    %v1628 = vtanh.pop %v1612
    %v1629 = vtanh.pop %v1613
    %v1630 = vtanh.pop %v1614
    %v1631 = vtanh.pop %v1615
    %v1632 = vtanh.pop %v1616
    %v1633 = vtanh.pop %v1617
    %v1634 = vtanh.pop %v1618
    %v1635 = vtanh.pop %v1619
    %v1636 = vtanh.pop %v1620
    %v1637 = vtanh.pop %v1621
    %v1638 = vtanh.pop %v1622
    %v1639 = vadd.f32 %v1623, 1.0
    %v1640 = vadd.f32 %v1624, 1.0
    %v1641 = vadd.f32 %v1625, 1.0
    %v1642 = vadd.f32 %v1626, 1.0
    %v1643 = vadd.f32 %v1627, 1.0
    %v1644 = vadd.f32 %v1628, 1.0
    %v1645 = vadd.f32 %v1629, 1.0
    %v1646 = vadd.f32 %v1630, 1.0
    %v1647 = vadd.f32 %v1631, 1.0
    %v1648 = vadd.f32 %v1632, 1.0
    %v1649 = vadd.f32 %v1633, 1.0
    %v1650 = vadd.f32 %v1634, 1.0
    %v1651 = vadd.f32 %v1635, 1.0
    %v1652 = vadd.f32 %v1636, 1.0
    %v1653 = vadd.f32 %v1637, 1.0
    %v1654 = vadd.f32 %v1638, 1.0
    %v1655 = vmul.f32 %v1639, 0.5
    %v1656 = vmul.f32 %v1640, 0.5
    %v1657 = vmul.f32 %v1641, 0.5
    %v1658 = vmul.f32 %v1642, 0.5
    %v1659 = vmul.f32 %v1643, 0.5
    %v1660 = vmul.f32 %v1644, 0.5
    %v1661 = vmul.f32 %v1645, 0.5
    %v1662 = vmul.f32 %v1646, 0.5
    %v1663 = vmul.f32 %v1647, 0.5
    %v1664 = vmul.f32 %v1648, 0.5
    %v1665 = vmul.f32 %v1649, 0.5
    %v1666 = vmul.f32 %v1650, 0.5
    %v1667 = vmul.f32 %v1651, 0.5
    %v1668 = vmul.f32 %v1652, 0.5
    %v1669 = vmul.f32 %v1653, 0.5
    %v1670 = vmul.f32 %v1654, 0.5
    %v1671 = vmul.f32 %v242, %v1655
    %v1672 = vmul.f32 %v244, %v1656
    %v1673 = vmul.f32 %v246, %v1657
    %v1674 = vmul.f32 %v248, %v1658
    %v1675 = vmul.f32 %v252, %v1659
    %v1676 = vmul.f32 %v254, %v1660
    %v1677 = vmul.f32 %v256, %v1661
    %v1678 = vmul.f32 %v258, %v1662
    %v1679 = vmul.f32 %v262, %v1663
    %v1680 = vmul.f32 %v264, %v1664
    %v1681 = vmul.f32 %v266, %v1665
    %v1682 = vmul.f32 %v268, %v1666
    %v1683 = vmul.f32 %v272, %v1667
    %v1684 = vmul.f32 %v274, %v1668
    %v1685 = vmul.f32 %v276, %v1669
    %v1686 = vmul.f32 %v278, %v1670
    %v1687 = vpack.c.bf16 %v1673, %v1671
    %v1688 = vpack.c.bf16 %v1674, %v1672
    %v1689 = vpack.c.bf16 %v1677, %v1675
    %v1690 = vpack.c.bf16 %v1678, %v1676
    %v1691 = vpack.c.bf16 %v1681, %v1679
    %v1692 = vpack.c.bf16 %v1682, %v1680
    %v1693 = vpack.c.bf16 %v1685, %v1683
    %v1694 = vpack.c.bf16 %v1686, %v1684
    %v1695 = vmul.f32 %v1505, %v1505
    %v1696 = vmul.f32 %v1507, %v1507
    %v1697 = vmul.f32 %v1509, %v1509
    %v1698 = vmul.f32 %v1511, %v1511
    %v1699 = vmul.f32 %v1515, %v1515
    %v1700 = vmul.f32 %v1517, %v1517
    %v1701 = vmul.f32 %v1519, %v1519
    %v1702 = vmul.f32 %v1521, %v1521
    %v1703 = vmul.f32 %v1525, %v1525
    %v1704 = vmul.f32 %v1527, %v1527
    %v1705 = vmul.f32 %v1529, %v1529
    %v1706 = vmul.f32 %v1531, %v1531
    %v1707 = vmul.f32 %v1535, %v1535
    %v1708 = vmul.f32 %v1537, %v1537
    %v1709 = vmul.f32 %v1539, %v1539
    %v1710 = vmul.f32 %v1541, %v1541
    %v1711 = vmul.f32 %v1505, %v1695
    %v1712 = vmul.f32 %v1507, %v1696
    %v1713 = vmul.f32 %v1509, %v1697
    %v1714 = vmul.f32 %v1511, %v1698
    %v1715 = vmul.f32 %v1515, %v1699
    %v1716 = vmul.f32 %v1517, %v1700
    %v1717 = vmul.f32 %v1519, %v1701
    %v1718 = vmul.f32 %v1521, %v1702
    %v1719 = vmul.f32 %v1525, %v1703
    %v1720 = vmul.f32 %v1527, %v1704
    %v1721 = vmul.f32 %v1529, %v1705
    %v1722 = vmul.f32 %v1531, %v1706
    %v1723 = vmul.f32 %v1535, %v1707
    %v1724 = vmul.f32 %v1537, %v1708
    %v1725 = vmul.f32 %v1539, %v1709
    %v1726 = vmul.f32 %v1541, %v1710
    %v1727 = vmul.f32 %v1711, 0.044715
    %v1728 = vmul.f32 %v1712, 0.044715
    %v1729 = vmul.f32 %v1713, 0.044715
    %v1730 = vmul.f32 %v1714, 0.044715
    %v1731 = vmul.f32 %v1715, 0.044715
    %v1732 = vmul.f32 %v1716, 0.044715
    %v1733 = vmul.f32 %v1717, 0.044715
    %v1734 = vmul.f32 %v1718, 0.044715
    %v1735 = vmul.f32 %v1719, 0.044715
    %v1736 = vmul.f32 %v1720, 0.044715
    %v1737 = vmul.f32 %v1721, 0.044715
    %v1738 = vmul.f32 %v1722, 0.044715
    %v1739 = vmul.f32 %v1723, 0.044715
    %v1740 = vmul.f32 %v1724, 0.044715
    %v1741 = vmul.f32 %v1725, 0.044715
    %v1742 = vmul.f32 %v1726, 0.044715
    %v1743 = vadd.f32 %v1505, %v1727
    %v1744 = vadd.f32 %v1507, %v1728
    %v1745 = vadd.f32 %v1509, %v1729
    %v1746 = vadd.f32 %v1511, %v1730
    %v1747 = vadd.f32 %v1515, %v1731
    %v1748 = vadd.f32 %v1517, %v1732
    %v1749 = vadd.f32 %v1519, %v1733
    %v1750 = vadd.f32 %v1521, %v1734
    %v1751 = vadd.f32 %v1525, %v1735
    %v1752 = vadd.f32 %v1527, %v1736
    %v1753 = vadd.f32 %v1529, %v1737
    %v1754 = vadd.f32 %v1531, %v1738
    %v1755 = vadd.f32 %v1535, %v1739
    %v1756 = vadd.f32 %v1537, %v1740
    %v1757 = vadd.f32 %v1539, %v1741
    %v1758 = vadd.f32 %v1541, %v1742
    %v1759 = vmul.f32 %v1743, 0.7978846
    %v1760 = vmul.f32 %v1744, 0.7978846
    %v1761 = vmul.f32 %v1745, 0.7978846
    %v1762 = vmul.f32 %v1746, 0.7978846
    %v1763 = vmul.f32 %v1747, 0.7978846
    %v1764 = vmul.f32 %v1748, 0.7978846
    %v1765 = vmul.f32 %v1749, 0.7978846
    %v1766 = vmul.f32 %v1750, 0.7978846
    %v1767 = vmul.f32 %v1751, 0.7978846
    %v1768 = vmul.f32 %v1752, 0.7978846
    %v1769 = vmul.f32 %v1753, 0.7978846
    %v1770 = vmul.f32 %v1754, 0.7978846
    %v1771 = vmul.f32 %v1755, 0.7978846
    %v1772 = vmul.f32 %v1756, 0.7978846
    %v1773 = vmul.f32 %v1757, 0.7978846
    %v1774 = vmul.f32 %v1758, 0.7978846
    %v1775 = vtanh.pop %v1759
    %v1776 = vtanh.pop %v1760
    %v1777 = vtanh.pop %v1761
    %v1778 = vtanh.pop %v1762
    %v1779 = vtanh.pop %v1763
    %v1780 = vtanh.pop %v1764
    %v1781 = vtanh.pop %v1765
    %v1782 = vtanh.pop %v1766
    %v1783 = vtanh.pop %v1767
    %v1784 = vtanh.pop %v1768
    %v1785 = vtanh.pop %v1769
    %v1786 = vtanh.pop %v1770
    %v1787 = vtanh.pop %v1771
    %v1788 = vtanh.pop %v1772
    %v1789 = vtanh.pop %v1773
    %v1790 = vtanh.pop %v1774
    %v1791 = vadd.f32 %v1775, 1.0
    %v1792 = vadd.f32 %v1776, 1.0
    %v1793 = vadd.f32 %v1777, 1.0
    %v1794 = vadd.f32 %v1778, 1.0
    %v1795 = vadd.f32 %v1779, 1.0
    %v1796 = vadd.f32 %v1780, 1.0
    %v1797 = vadd.f32 %v1781, 1.0
    %v1798 = vadd.f32 %v1782, 1.0
    %v1799 = vadd.f32 %v1783, 1.0
    %v1800 = vadd.f32 %v1784, 1.0
    %v1801 = vadd.f32 %v1785, 1.0
    %v1802 = vadd.f32 %v1786, 1.0
    %v1803 = vadd.f32 %v1787, 1.0
    %v1804 = vadd.f32 %v1788, 1.0
    %v1805 = vadd.f32 %v1789, 1.0
    %v1806 = vadd.f32 %v1790, 1.0
    %v1807 = vmul.f32 %v1791, 0.5
    %v1808 = vmul.f32 %v1792, 0.5
    %v1809 = vmul.f32 %v1793, 0.5
    %v1810 = vmul.f32 %v1794, 0.5
    %v1811 = vmul.f32 %v1795, 0.5
    %v1812 = vmul.f32 %v1796, 0.5
    %v1813 = vmul.f32 %v1797, 0.5
    %v1814 = vmul.f32 %v1798, 0.5
    %v1815 = vmul.f32 %v1799, 0.5
    %v1816 = vmul.f32 %v1800, 0.5
    %v1817 = vmul.f32 %v1801, 0.5
    %v1818 = vmul.f32 %v1802, 0.5
    %v1819 = vmul.f32 %v1803, 0.5
    %v1820 = vmul.f32 %v1804, 0.5
    %v1821 = vmul.f32 %v1805, 0.5
    %v1822 = vmul.f32 %v1806, 0.5
    %v1823 = vmul.f32 %v1505, %v1807
    %v1824 = vmul.f32 %v1507, %v1808
    %v1825 = vmul.f32 %v1509, %v1809
    %v1826 = vmul.f32 %v1511, %v1810
    %v1827 = vmul.f32 %v1515, %v1811
    %v1828 = vmul.f32 %v1517, %v1812
    %v1829 = vmul.f32 %v1519, %v1813
    %v1830 = vmul.f32 %v1521, %v1814
    %v1831 = vmul.f32 %v1525, %v1815
    %v1832 = vmul.f32 %v1527, %v1816
    %v1833 = vmul.f32 %v1529, %v1817
    %v1834 = vmul.f32 %v1531, %v1818
    %v1835 = vmul.f32 %v1535, %v1819
    %v1836 = vmul.f32 %v1537, %v1820
    %v1837 = vmul.f32 %v1539, %v1821
    %v1838 = vmul.f32 %v1541, %v1822
    %v1839 = vpack.c.bf16 %v1825, %v1823
    %v1840 = vpack.c.bf16 %v1826, %v1824
    %v1841 = vpack.c.bf16 %v1829, %v1827
    %v1842 = vpack.c.bf16 %v1830, %v1828
    %v1843 = vpack.c.bf16 %v1833, %v1831
    %v1844 = vpack.c.bf16 %v1834, %v1832
    %v1845 = vpack.c.bf16 %v1837, %v1835
    %v1846 = vpack.c.bf16 %v1838, %v1836
    %v1847 = vld [vmem:[%s4] sm:$0xf]
    %v1848 = vld [vmem:[%s4 + $0x4] sm:$0xf]
    %v1849 = vld [vmem:[%s4 + $0x8] sm:$0xf]
    %v1850 = vld [vmem:[%s4 + $0xc] sm:$0xf]
    %v1851 = vld [vmem:[%s4 + $0x10] sm:$0xf]
    %v1852 = vld [vmem:[%s4 + $0x14] sm:$0xf]
    %v1853 = vld [vmem:[%s4 + $0x18] sm:$0xf]
    %v1854 = vld [vmem:[%s4 + $0x1c] sm:$0xf]
    %v1855 = vld [vmem:[%s4 + $0x20] sm:$0xf]
    %v1856 = vld [vmem:[%s4 + $0x24] sm:$0xf]
    %v1857 = vld [vmem:[%s4 + $0x28] sm:$0xf]
    %v1858 = vld [vmem:[%s4 + $0x2c] sm:$0xf]
    %v1859 = vld [vmem:[%s4 + $0x30] sm:$0xf]
    %v1860 = vld [vmem:[%s4 + $0x34] sm:$0xf]
    %v1861 = vld [vmem:[%s4 + $0x38] sm:$0xf]
    %v1862 = vld [vmem:[%s4 + $0x3c] sm:$0xf]
    %v1863 = vld [vmem:[%s4 + $0x40] sm:$0xf]
    %v1864 = vld [vmem:[%s4 + $0x44] sm:$0xf]
    %v1865 = vld [vmem:[%s4 + $0x48] sm:$0xf]
    %v1866 = vld [vmem:[%s4 + $0x4c] sm:$0xf]
    %v1867 = vld [vmem:[%s4 + $0x50] sm:$0xf]
    %v1868 = vld [vmem:[%s4 + $0x54] sm:$0xf]
    %v1869 = vld [vmem:[%s4 + $0x58] sm:$0xf]
    %v1870 = vld [vmem:[%s4 + $0x5c] sm:$0xf]
    %v1871 = vld [vmem:[%s4 + $0x60] sm:$0xf]
    %v1872 = vld [vmem:[%s4 + $0x64] sm:$0xf]
    %v1873 = vld [vmem:[%s4 + $0x68] sm:$0xf]
    %v1874 = vld [vmem:[%s4 + $0x6c] sm:$0xf]
    %v1875 = vld [vmem:[%s4 + $0x70] sm:$0xf]
    %v1876 = vld [vmem:[%s4 + $0x74] sm:$0xf]
    %v1877 = vld [vmem:[%s4 + $0x78] sm:$0xf]
    %v1878 = vld [vmem:[%s4 + $0x7c] sm:$0xf]
    %v1911 = vunpack.c.l.b16 %v1847
    %v1912 = vunpack.c.l.b16 %v1848
    %v1913 = vunpack.c.l.b16 %v1849
    %v1914 = vunpack.c.l.b16 %v1850
    %v1915 = vunpack.c.l.b16 %v1851
    %v1916 = vunpack.c.l.b16 %v1852
    %v1917 = vunpack.c.l.b16 %v1853
    %v1918 = vunpack.c.l.b16 %v1854
    %v1919 = vunpack.c.l.b16 %v1855
    %v1920 = vunpack.c.l.b16 %v1856
    %v1921 = vunpack.c.l.b16 %v1857
    %v1922 = vunpack.c.l.b16 %v1858
    %v1923 = vunpack.c.l.b16 %v1859
    %v1924 = vunpack.c.l.b16 %v1860
    %v1925 = vunpack.c.l.b16 %v1861
    %v1926 = vunpack.c.l.b16 %v1862
    %v1927 = vunpack.c.l.b16 %v1863
    %v1928 = vunpack.c.l.b16 %v1864
    %v1929 = vunpack.c.l.b16 %v1865
    %v1930 = vunpack.c.l.b16 %v1866
    %v1931 = vunpack.c.l.b16 %v1867
    %v1932 = vunpack.c.l.b16 %v1868
    %v1933 = vunpack.c.l.b16 %v1869
    %v1934 = vunpack.c.l.b16 %v1870
    %v1935 = vunpack.c.l.b16 %v1871
    %v1936 = vunpack.c.l.b16 %v1872
    %v1937 = vunpack.c.l.b16 %v1873
    %v1938 = vunpack.c.l.b16 %v1874
    %v1939 = vunpack.c.l.b16 %v1875
    %v1940 = vunpack.c.l.b16 %v1876
    %v1941 = vunpack.c.l.b16 %v1877
    %v1942 = vunpack.c.l.b16 %v1878
    %v1943 = vpack.c.b16 %v1912, %v1911
    %v1944 = vpack.c.b16 %v1914, %v1913
    %v1945 = vpack.c.b16 %v1916, %v1915
    %v1946 = vpack.c.b16 %v1918, %v1917
    %v1947 = vpack.c.b16 %v1920, %v1919
    %v1948 = vpack.c.b16 %v1922, %v1921
    %v1949 = vpack.c.b16 %v1924, %v1923
    %v1950 = vpack.c.b16 %v1926, %v1925
    %v1951 = vpack.c.b16 %v1928, %v1927
    %v1952 = vpack.c.b16 %v1930, %v1929
    %v1953 = vpack.c.b16 %v1932, %v1931
    %v1954 = vpack.c.b16 %v1934, %v1933
    %v1955 = vpack.c.b16 %v1936, %v1935
    %v1956 = vpack.c.b16 %v1938, %v1937
    %v1957 = vpack.c.b16 %v1940, %v1939
    %v1958 = vpack.c.b16 %v1942, %v1941
    %1975 = vmatprep.subr.bf16.mxu0 0
    %1976 = vmatpush1.bf16.msra.mxu0 %v1943
    %1977 = vmatprep.subr.bf16.mxu0 0
    %1978 = vmatpush1.bf16.msra.mxu0 %v1944
    %1979 = vmatprep.subr.bf16.mxu0 0
    %1980 = vmatpush1.bf16.msra.mxu0 %v1945
    %1981 = vmatprep.subr.bf16.mxu0 0
    %1982 = vmatpush1.bf16.msra.mxu0 %v1946
    %1983 = vmatprep.subr.bf16.mxu0 0
    %1984 = vmatpush1.bf16.msra.mxu0 %v1947
    %1985 = vmatprep.subr.bf16.mxu0 0
    %1986 = vmatpush1.bf16.msra.mxu0 %v1948
    %1987 = vmatprep.subr.bf16.mxu0 0
    %1988 = vmatpush1.bf16.msra.mxu0 %v1949
    %1989 = vmatprep.subr.bf16.mxu0 0
    %1990 = vmatpush1.bf16.msra.mxu0 %v1950
    %1991 = vmatprep.subr.bf16.mxu0 0
    %1992 = vmatpush1.bf16.msra.mxu0 %v1951
    %1993 = vmatprep.subr.bf16.mxu0 0
    %1994 = vmatpush1.bf16.msra.mxu0 %v1952
    %1995 = vmatprep.subr.bf16.mxu0 0
    %1996 = vmatpush1.bf16.msra.mxu0 %v1953
    %1997 = vmatprep.subr.bf16.mxu0 0
    %1998 = vmatpush1.bf16.msra.mxu0 %v1954
    %1999 = vmatprep.subr.bf16.mxu0 0
    %2000 = vmatpush1.bf16.msra.mxu0 %v1955
    %2001 = vmatprep.subr.bf16.mxu0 0
    %2002 = vmatpush1.bf16.msra.mxu0 %v1956
    %2003 = vmatprep.subr.bf16.mxu0 0
    %2004 = vmatpush1.bf16.msra.mxu0 %v1957
    %2005 = vmatprep.subr.bf16.mxu0 0
    %2006 = vmatpush1.bf16.msra.mxu0 %v1958
    %2007 = vmatprep.mubr.bf16.mxu0 %v1688
    %2008 = vmatmul.mubr.bf16.gmra.mrb[0].mxu0 %v1687
    %v2009 = vpop.f32.mrb[0].mxu0
    %v2010 = vadd.f32 %v67, %v2009
    %v2011 = vpop.f32.mrb[0].mxu0
    %v2012 = vpop.f32.mrb[0].mxu0
    %v2013 = vadd.f32 %v67, %v2012
    %v2014 = vpop.f32.mrb[0].mxu0
    %2015 = vmatprep.mubr.bf16.mxu0 %v1690
    %2016 = vmatmul.mubr.bf16.gmra.mrb[0].mxu0 %v1689
    %v2017 = vpop.f32.mrb[0].mxu0
    %v2018 = vadd.f32 %v67, %v2017
    %v2019 = vpop.f32.mrb[0].mxu0
    %v2020 = vpop.f32.mrb[0].mxu0
    %v2021 = vadd.f32 %v67, %v2020
    %v2022 = vpop.f32.mrb[0].mxu0
    %2023 = vmatprep.mubr.bf16.mxu0 %v1692
    %2024 = vmatmul.mubr.bf16.gmra.mrb[0].mxu0 %v1691
    %v2025 = vpop.f32.mrb[0].mxu0
    %v2026 = vadd.f32 %v67, %v2025
    %v2027 = vpop.f32.mrb[0].mxu0
    %v2028 = vpop.f32.mrb[0].mxu0
    %v2029 = vadd.f32 %v67, %v2028
    %v2030 = vpop.f32.mrb[0].mxu0
    %2031 = vmatprep.mubr.bf16.mxu0 %v1694
    %2032 = vmatmul.mubr.bf16.gmra.mrb[0].mxu0 %v1693
    %v2033 = vpop.f32.mrb[0].mxu0
    %v2034 = vadd.f32 %v67, %v2033
    %v2035 = vpop.f32.mrb[0].mxu0
    %v2036 = vpop.f32.mrb[0].mxu0
    %v2037 = vadd.f32 %v67, %v2036
    %v2038 = vpop.f32.mrb[0].mxu0
    %2039 = vdwg.mxu0
    %2040 = vmatprep.subr.bf16.mxu0 0
    %2041 = vmatpush1.bf16.msra.mxu0 %v1943
    %2042 = vmatprep.subr.bf16.mxu0 0
    %2043 = vmatpush1.bf16.msra.mxu0 %v1944
    %2044 = vmatprep.subr.bf16.mxu0 0
    %2045 = vmatpush1.bf16.msra.mxu0 %v1945
    %2046 = vmatprep.subr.bf16.mxu0 0
    %2047 = vmatpush1.bf16.msra.mxu0 %v1946
    %2048 = vmatprep.subr.bf16.mxu0 0
    %2049 = vmatpush1.bf16.msra.mxu0 %v1947
    %2050 = vmatprep.subr.bf16.mxu0 0
    %2051 = vmatpush1.bf16.msra.mxu0 %v1948
    %2052 = vmatprep.subr.bf16.mxu0 0
    %2053 = vmatpush1.bf16.msra.mxu0 %v1949
    %2054 = vmatprep.subr.bf16.mxu0 0
    %2055 = vmatpush1.bf16.msra.mxu0 %v1950
    %2056 = vmatprep.subr.bf16.mxu0 0
    %2057 = vmatpush1.bf16.msra.mxu0 %v1951
    %2058 = vmatprep.subr.bf16.mxu0 0
    %2059 = vmatpush1.bf16.msra.mxu0 %v1952
    %2060 = vmatprep.subr.bf16.mxu0 0
    %2061 = vmatpush1.bf16.msra.mxu0 %v1953
    %2062 = vmatprep.subr.bf16.mxu0 0
    %2063 = vmatpush1.bf16.msra.mxu0 %v1954
    %2064 = vmatprep.subr.bf16.mxu0 0
    %2065 = vmatpush1.bf16.msra.mxu0 %v1955
    %2066 = vmatprep.subr.bf16.mxu0 0
    %2067 = vmatpush1.bf16.msra.mxu0 %v1956
    %2068 = vmatprep.subr.bf16.mxu0 0
    %2069 = vmatpush1.bf16.msra.mxu0 %v1957
    %2070 = vmatprep.subr.bf16.mxu0 0
    %2071 = vmatpush1.bf16.msra.mxu0 %v1958
    %2072 = vmatprep.mubr.bf16.mxu0 %v1840
    %2073 = vmatmul.mubr.bf16.gmra.mrb[0].mxu0 %v1839
    %v2074 = vpop.f32.mrb[0].mxu0
    %v2075 = vadd.f32 %v67, %v2074
    %v2076 = vpop.f32.mrb[0].mxu0
    %v2077 = vpop.f32.mrb[0].mxu0
    %v2078 = vadd.f32 %v67, %v2077
    %v2079 = vpop.f32.mrb[0].mxu0
    %2080 = vmatprep.mubr.bf16.mxu0 %v1842
    %2081 = vmatmul.mubr.bf16.gmra.mrb[0].mxu0 %v1841
    %v2082 = vpop.f32.mrb[0].mxu0
    %v2083 = vadd.f32 %v67, %v2082
    %v2084 = vpop.f32.mrb[0].mxu0
    %v2085 = vpop.f32.mrb[0].mxu0
    %v2086 = vadd.f32 %v67, %v2085
    %v2087 = vpop.f32.mrb[0].mxu0
    %2088 = vmatprep.mubr.bf16.mxu0 %v1844
    %2089 = vmatmul.mubr.bf16.gmra.mrb[0].mxu0 %v1843
    %v2090 = vpop.f32.mrb[0].mxu0
    %v2091 = vadd.f32 %v67, %v2090
    %v2092 = vpop.f32.mrb[0].mxu0
    %v2093 = vpop.f32.mrb[0].mxu0
    %v2094 = vadd.f32 %v67, %v2093
    %v2095 = vpop.f32.mrb[0].mxu0
    %2096 = vmatprep.mubr.bf16.mxu0 %v1846
    %2097 = vmatmul.mubr.bf16.gmra.mrb[0].mxu0 %v1845
    %v2098 = vpop.f32.mrb[0].mxu0
    %v2099 = vadd.f32 %v67, %v2098
    %v2100 = vpop.f32.mrb[0].mxu0
    %v2101 = vpop.f32.mrb[0].mxu0
    %v2102 = vadd.f32 %v67, %v2101
    %v2103 = vpop.f32.mrb[0].mxu0
    %2104 = vdwg.mxu0
    %v2105 = vld [vmem:[#allocation7 + $0x3] ss:$0 sm:$0xff]
    %v2106 = vld [vmem:[#allocation7 + $0x4] ss:$0 sm:$0xff]
    %vm2107 = vcmask 80896
    %v2108 = vsel %vm2107, %v2010, 0.0
    %2109 = vadd.xlane.f32.xlu0 %v2108
    %v2110 = vpop.xlane.xlu0 %2109
    %v2111 = vsel %vm2107, %v2013, 0.0
    %2112 = vadd.xlane.f32.xlu0 %v2111
    %v2113 = vpop.xlane.xlu0 %2112
    %v2114 = vsel %vm2107, %v2018, 0.0
    %2115 = vadd.xlane.f32.xlu0 %v2114
    %v2116 = vpop.xlane.xlu0 %2115
    %v2117 = vsel %vm2107, %v2021, 0.0
    %2118 = vadd.xlane.f32.xlu0 %v2117
    %v2119 = vpop.xlane.xlu0 %2118
    %v2120 = vsel %vm2107, %v2026, 0.0
    %2121 = vadd.xlane.f32.xlu0 %v2120
    %v2122 = vpop.xlane.xlu0 %2121
    %v2123 = vsel %vm2107, %v2029, 0.0
    %2124 = vadd.xlane.f32.xlu0 %v2123
    %v2125 = vpop.xlane.xlu0 %2124
    %v2126 = vsel %vm2107, %v2034, 0.0
    %2127 = vadd.xlane.f32.xlu0 %v2126
    %v2128 = vpop.xlane.xlu0 %2127
    %v2129 = vsel %vm2107, %v2037, 0.0
    %2130 = vadd.xlane.f32.xlu0 %v2129
    %v2131 = vpop.xlane.xlu0 %2130
    %v2132 = vrcp.pop 10.0
    %v2133 = vmul.f32 %v2110, %v2132
    %v2134 = vmul.f32 %v2113, %v2132
    %v2135 = vmul.f32 %v2116, %v2132
    %v2136 = vmul.f32 %v2119, %v2132
    %v2137 = vmul.f32 %v2122, %v2132
    %v2138 = vmul.f32 %v2125, %v2132
    %v2139 = vmul.f32 %v2128, %v2132
    %v2140 = vmul.f32 %v2131, %v2132
    %v2141 = vsub.f32 %v2010, %v2133
    %v2142 = vsub.f32 %v2013, %v2134
    %v2143 = vsub.f32 %v2018, %v2135
    %v2144 = vsub.f32 %v2021, %v2136
    %v2145 = vsub.f32 %v2026, %v2137
    %v2146 = vsub.f32 %v2029, %v2138
    %v2147 = vsub.f32 %v2034, %v2139
    %v2148 = vsub.f32 %v2037, %v2140
    %v2149 = vmul.f32 %v2141, %v2141
    %v2150 = vmul.f32 %v2142, %v2142
    %v2151 = vmul.f32 %v2143, %v2143
    %v2152 = vmul.f32 %v2144, %v2144
    %v2153 = vmul.f32 %v2145, %v2145
    %v2154 = vmul.f32 %v2146, %v2146
    %v2155 = vmul.f32 %v2147, %v2147
    %v2156 = vmul.f32 %v2148, %v2148
    %v2157 = vsel %vm2107, %v2149, 0.0
    %2158 = vadd.xlane.f32.xlu0 %v2157
    %v2159 = vpop.xlane.xlu0 %2158
    %v2160 = vsel %vm2107, %v2150, 0.0
    %2161 = vadd.xlane.f32.xlu0 %v2160
    %v2162 = vpop.xlane.xlu0 %2161
    %v2163 = vsel %vm2107, %v2151, 0.0
    %2164 = vadd.xlane.f32.xlu0 %v2163
    %v2165 = vpop.xlane.xlu0 %2164
    %v2166 = vsel %vm2107, %v2152, 0.0
    %2167 = vadd.xlane.f32.xlu0 %v2166
    %v2168 = vpop.xlane.xlu0 %2167
    %v2169 = vsel %vm2107, %v2153, 0.0
    %2170 = vadd.xlane.f32.xlu0 %v2169
    %v2171 = vpop.xlane.xlu0 %2170
    %v2172 = vsel %vm2107, %v2154, 0.0
    %2173 = vadd.xlane.f32.xlu0 %v2172
    %v2174 = vpop.xlane.xlu0 %2173
    %v2175 = vsel %vm2107, %v2155, 0.0
    %2176 = vadd.xlane.f32.xlu0 %v2175
    %v2177 = vpop.xlane.xlu0 %2176
    %v2178 = vsel %vm2107, %v2156, 0.0
    %2179 = vadd.xlane.f32.xlu0 %v2178
    %v2180 = vpop.xlane.xlu0 %2179
    %v2181 = vmul.f32 %v2159, %v2132
    %v2182 = vmul.f32 %v2162, %v2132
    %v2183 = vmul.f32 %v2165, %v2132
    %v2184 = vmul.f32 %v2168, %v2132
    %v2185 = vmul.f32 %v2171, %v2132
    %v2186 = vmul.f32 %v2174, %v2132
    %v2187 = vmul.f32 %v2177, %v2132
    %v2188 = vmul.f32 %v2180, %v2132
    %v2189 = vadd.f32 %v2181, 1e-05
    %v2190 = vadd.f32 %v2182, 1e-05
    %v2191 = vadd.f32 %v2183, 1e-05
    %v2192 = vadd.f32 %v2184, 1e-05
    %v2193 = vadd.f32 %v2185, 1e-05
    %v2194 = vadd.f32 %v2186, 1e-05
    %v2195 = vadd.f32 %v2187, 1e-05
    %v2196 = vadd.f32 %v2188, 1e-05
    %v2197 = vrsqrt.pop %v2189
    %v2198 = vrsqrt.pop %v2190
    %v2199 = vrsqrt.pop %v2191
    %v2200 = vrsqrt.pop %v2192
    %v2201 = vrsqrt.pop %v2193
    %v2202 = vrsqrt.pop %v2194
    %v2203 = vrsqrt.pop %v2195
    %v2204 = vrsqrt.pop %v2196
    %v2205 = vmul.f32 %v2141, %v2197
    %v2206 = vmul.f32 %v2142, %v2198
    %v2207 = vmul.f32 %v2143, %v2199
    %v2208 = vmul.f32 %v2144, %v2200
    %v2209 = vmul.f32 %v2145, %v2201
    %v2210 = vmul.f32 %v2146, %v2202
    %v2211 = vmul.f32 %v2147, %v2203
    %v2212 = vmul.f32 %v2148, %v2204
    %v2213 = vmul.f32 %v2205, %v2105
    %v2214 = vmul.f32 %v2206, %v2105
    %v2215 = vmul.f32 %v2207, %v2105
    %v2216 = vmul.f32 %v2208, %v2105
    %v2217 = vmul.f32 %v2209, %v2105
    %v2218 = vmul.f32 %v2210, %v2105
    %v2219 = vmul.f32 %v2211, %v2105
    %v2220 = vmul.f32 %v2212, %v2105
    %v2221 = vadd.f32 %v2213, %v2106
    %v2222 = vadd.f32 %v2214, %v2106
    %v2223 = vadd.f32 %v2215, %v2106
    %v2224 = vadd.f32 %v2216, %v2106
    %v2225 = vadd.f32 %v2217, %v2106
    %v2226 = vadd.f32 %v2218, %v2106
    %v2227 = vadd.f32 %v2219, %v2106
    %v2228 = vadd.f32 %v2220, %v2106
    %v2229 = vmul.f32 %v2221, %v2221
    %v2230 = vmul.f32 %v2222, %v2222
    %v2231 = vmul.f32 %v2223, %v2223
    %v2232 = vmul.f32 %v2224, %v2224
    %v2233 = vmul.f32 %v2225, %v2225
    %v2234 = vmul.f32 %v2226, %v2226
    %v2235 = vmul.f32 %v2227, %v2227
    %v2236 = vmul.f32 %v2228, %v2228
    %v2237 = vsel %vm2107, %v2229, 0.0
    %2238 = vadd.xlane.f32.xlu0 %v2237
    %v2239 = vpop.xlane.xlu0 %2238
    %v2240 = vsel %vm2107, %v2230, 0.0
    %2241 = vadd.xlane.f32.xlu0 %v2240
    %v2242 = vpop.xlane.xlu0 %2241
    %v2243 = vsel %vm2107, %v2231, 0.0
    %2244 = vadd.xlane.f32.xlu0 %v2243
    %v2245 = vpop.xlane.xlu0 %2244
    %v2246 = vsel %vm2107, %v2232, 0.0
    %2247 = vadd.xlane.f32.xlu0 %v2246
    %v2248 = vpop.xlane.xlu0 %2247
    %v2249 = vsel %vm2107, %v2233, 0.0
    %2250 = vadd.xlane.f32.xlu0 %v2249
    %v2251 = vpop.xlane.xlu0 %2250
    %v2252 = vsel %vm2107, %v2234, 0.0
    %2253 = vadd.xlane.f32.xlu0 %v2252
    %v2254 = vpop.xlane.xlu0 %2253
    %v2255 = vsel %vm2107, %v2235, 0.0
    %2256 = vadd.xlane.f32.xlu0 %v2255
    %v2257 = vpop.xlane.xlu0 %2256
    %v2258 = vsel %vm2107, %v2236, 0.0
    %2259 = vadd.xlane.f32.xlu0 %v2258
    %v2260 = vpop.xlane.xlu0 %2259
    %v2261 = vrsqrt.pop %v2239
    %v2262 = vrsqrt.pop %v2242
    %v2263 = vrsqrt.pop %v2245
    %v2264 = vrsqrt.pop %v2248
    %v2265 = vrsqrt.pop %v2251
    %v2266 = vrsqrt.pop %v2254
    %v2267 = vrsqrt.pop %v2257
    %v2268 = vrsqrt.pop %v2260
    %v2269 = vmul.f32 %v2221, %v2261
    %v2270 = vmul.f32 %v2222, %v2262
    %v2271 = vmul.f32 %v2223, %v2263
    %v2272 = vmul.f32 %v2224, %v2264
    %v2273 = vmul.f32 %v2225, %v2265
    %v2274 = vmul.f32 %v2226, %v2266
    %v2275 = vmul.f32 %v2227, %v2267
    %v2276 = vmul.f32 %v2228, %v2268
    %2285 = vrot.lane.b32.xlu0 %v2075, 118
    %v2286 = vpop.permute.xlu0 %2285
    %2287 = vrot.lane.b32.xlu0 %v2078, 118
    %v2288 = vpop.permute.xlu0 %2287
    %2289 = vrot.lane.b32.xlu0 %v2083, 118
    %v2290 = vpop.permute.xlu0 %2289
    %2291 = vrot.lane.b32.xlu0 %v2086, 118
    %v2292 = vpop.permute.xlu0 %2291
    %2293 = vrot.lane.b32.xlu0 %v2091, 118
    %v2294 = vpop.permute.xlu0 %2293
    %2295 = vrot.lane.b32.xlu0 %v2094, 118
    %v2296 = vpop.permute.xlu0 %2295
    %2297 = vrot.lane.b32.xlu0 %v2099, 118
    %v2298 = vpop.permute.xlu0 %2297
    %2299 = vrot.lane.b32.xlu0 %v2102, 118
    %v2300 = vpop.permute.xlu0 %2299
    %v2309 = vsel %vm2107, %v2286, 0.0
    %2310 = vadd.xlane.f32.xlu0 %v2309
    %v2311 = vpop.xlane.xlu0 %2310
    %v2312 = vsel %vm2107, %v2288, 0.0
    %2313 = vadd.xlane.f32.xlu0 %v2312
    %v2314 = vpop.xlane.xlu0 %2313
    %v2315 = vsel %vm2107, %v2290, 0.0
    %2316 = vadd.xlane.f32.xlu0 %v2315
    %v2317 = vpop.xlane.xlu0 %2316
    %v2318 = vsel %vm2107, %v2292, 0.0
    %2319 = vadd.xlane.f32.xlu0 %v2318
    %v2320 = vpop.xlane.xlu0 %2319
    %v2321 = vsel %vm2107, %v2294, 0.0
    %2322 = vadd.xlane.f32.xlu0 %v2321
    %v2323 = vpop.xlane.xlu0 %2322
    %v2324 = vsel %vm2107, %v2296, 0.0
    %2325 = vadd.xlane.f32.xlu0 %v2324
    %v2326 = vpop.xlane.xlu0 %2325
    %v2327 = vsel %vm2107, %v2298, 0.0
    %2328 = vadd.xlane.f32.xlu0 %v2327
    %v2329 = vpop.xlane.xlu0 %2328
    %v2330 = vsel %vm2107, %v2300, 0.0
    %2331 = vadd.xlane.f32.xlu0 %v2330
    %v2332 = vpop.xlane.xlu0 %2331
    %v2333 = vmul.f32 %v2311, %v2132
    %v2334 = vmul.f32 %v2314, %v2132
    %v2335 = vmul.f32 %v2317, %v2132
    %v2336 = vmul.f32 %v2320, %v2132
    %v2337 = vmul.f32 %v2323, %v2132
    %v2338 = vmul.f32 %v2326, %v2132
    %v2339 = vmul.f32 %v2329, %v2132
    %v2340 = vmul.f32 %v2332, %v2132
    %v2341 = vsub.f32 %v2075, %v2333
    %v2342 = vsub.f32 %v2078, %v2334
    %v2343 = vsub.f32 %v2083, %v2335
    %v2344 = vsub.f32 %v2086, %v2336
    %v2345 = vsub.f32 %v2091, %v2337
    %v2346 = vsub.f32 %v2094, %v2338
    %v2347 = vsub.f32 %v2099, %v2339
    %v2348 = vsub.f32 %v2102, %v2340
    %v2349 = vmul.f32 %v2341, %v2341
    %v2350 = vmul.f32 %v2342, %v2342
    %v2351 = vmul.f32 %v2343, %v2343
    %v2352 = vmul.f32 %v2344, %v2344
    %v2353 = vmul.f32 %v2345, %v2345
    %v2354 = vmul.f32 %v2346, %v2346
    %v2355 = vmul.f32 %v2347, %v2347
    %v2356 = vmul.f32 %v2348, %v2348
    %2365 = vrot.lane.b32.xlu0 %v2349, 118
    %v2366 = vpop.permute.xlu0 %2365
    %2367 = vrot.lane.b32.xlu0 %v2350, 118
    %v2368 = vpop.permute.xlu0 %2367
    %2369 = vrot.lane.b32.xlu0 %v2351, 118
    %v2370 = vpop.permute.xlu0 %2369
    %2371 = vrot.lane.b32.xlu0 %v2352, 118
    %v2372 = vpop.permute.xlu0 %2371
    %2373 = vrot.lane.b32.xlu0 %v2353, 118
    %v2374 = vpop.permute.xlu0 %2373
    %2375 = vrot.lane.b32.xlu0 %v2354, 118
    %v2376 = vpop.permute.xlu0 %2375
    %2377 = vrot.lane.b32.xlu0 %v2355, 118
    %v2378 = vpop.permute.xlu0 %2377
    %2379 = vrot.lane.b32.xlu0 %v2356, 118
    %v2380 = vpop.permute.xlu0 %2379
    %v2389 = vsel %vm2107, %v2366, 0.0
    %2390 = vadd.xlane.f32.xlu0 %v2389
    %v2391 = vpop.xlane.xlu0 %2390
    %v2392 = vsel %vm2107, %v2368, 0.0
    %2393 = vadd.xlane.f32.xlu0 %v2392
    %v2394 = vpop.xlane.xlu0 %2393
    %v2395 = vsel %vm2107, %v2370, 0.0
    %2396 = vadd.xlane.f32.xlu0 %v2395
    %v2397 = vpop.xlane.xlu0 %2396
    %v2398 = vsel %vm2107, %v2372, 0.0
    %2399 = vadd.xlane.f32.xlu0 %v2398
    %v2400 = vpop.xlane.xlu0 %2399
    %v2401 = vsel %vm2107, %v2374, 0.0
    %2402 = vadd.xlane.f32.xlu0 %v2401
    %v2403 = vpop.xlane.xlu0 %2402
    %v2404 = vsel %vm2107, %v2376, 0.0
    %2405 = vadd.xlane.f32.xlu0 %v2404
    %v2406 = vpop.xlane.xlu0 %2405
    %v2407 = vsel %vm2107, %v2378, 0.0
    %2408 = vadd.xlane.f32.xlu0 %v2407
    %v2409 = vpop.xlane.xlu0 %2408
    %v2410 = vsel %vm2107, %v2380, 0.0
    %2411 = vadd.xlane.f32.xlu0 %v2410
    %v2412 = vpop.xlane.xlu0 %2411
    %v2413 = vmul.f32 %v2391, %v2132
    %v2414 = vmul.f32 %v2394, %v2132
    %v2415 = vmul.f32 %v2397, %v2132
    %v2416 = vmul.f32 %v2400, %v2132
    %v2417 = vmul.f32 %v2403, %v2132
    %v2418 = vmul.f32 %v2406, %v2132
    %v2419 = vmul.f32 %v2409, %v2132
    %v2420 = vmul.f32 %v2412, %v2132
    %v2421 = vadd.f32 %v2413, 1e-05
    %v2422 = vadd.f32 %v2414, 1e-05
    %v2423 = vadd.f32 %v2415, 1e-05
    %v2424 = vadd.f32 %v2416, 1e-05
    %v2425 = vadd.f32 %v2417, 1e-05
    %v2426 = vadd.f32 %v2418, 1e-05
    %v2427 = vadd.f32 %v2419, 1e-05
    %v2428 = vadd.f32 %v2420, 1e-05
    %v2429 = vrsqrt.pop %v2421
    %v2430 = vrsqrt.pop %v2422
    %v2431 = vrsqrt.pop %v2423
    %v2432 = vrsqrt.pop %v2424
    %v2433 = vrsqrt.pop %v2425
    %v2434 = vrsqrt.pop %v2426
    %v2435 = vrsqrt.pop %v2427
    %v2436 = vrsqrt.pop %v2428
    %v2437 = vmul.f32 %v2341, %v2429
    %v2438 = vmul.f32 %v2342, %v2430
    %v2439 = vmul.f32 %v2343, %v2431
    %v2440 = vmul.f32 %v2344, %v2432
    %v2441 = vmul.f32 %v2345, %v2433
    %v2442 = vmul.f32 %v2346, %v2434
    %v2443 = vmul.f32 %v2347, %v2435
    %v2444 = vmul.f32 %v2348, %v2436
    %v2445 = vmul.f32 %v2437, %v2105
    %v2446 = vmul.f32 %v2438, %v2105
    %v2447 = vmul.f32 %v2439, %v2105
    %v2448 = vmul.f32 %v2440, %v2105
    %v2449 = vmul.f32 %v2441, %v2105
    %v2450 = vmul.f32 %v2442, %v2105
    %v2451 = vmul.f32 %v2443, %v2105
    %v2452 = vmul.f32 %v2444, %v2105
    %v2453 = vadd.f32 %v2445, %v2106
    %v2454 = vadd.f32 %v2446, %v2106
    %v2455 = vadd.f32 %v2447, %v2106
    %v2456 = vadd.f32 %v2448, %v2106
    %v2457 = vadd.f32 %v2449, %v2106
    %v2458 = vadd.f32 %v2450, %v2106
    %v2459 = vadd.f32 %v2451, %v2106
    %v2460 = vadd.f32 %v2452, %v2106
    %v2461 = vmul.f32 %v2453, %v2453
    %v2462 = vmul.f32 %v2454, %v2454
    %v2463 = vmul.f32 %v2455, %v2455
    %v2464 = vmul.f32 %v2456, %v2456
    %v2465 = vmul.f32 %v2457, %v2457
    %v2466 = vmul.f32 %v2458, %v2458
    %v2467 = vmul.f32 %v2459, %v2459
    %v2468 = vmul.f32 %v2460, %v2460
    %2477 = vrot.lane.b32.xlu0 %v2461, 118
    %v2478 = vpop.permute.xlu0 %2477
    %2479 = vrot.lane.b32.xlu0 %v2462, 118
    %v2480 = vpop.permute.xlu0 %2479
    %2481 = vrot.lane.b32.xlu0 %v2463, 118
    %v2482 = vpop.permute.xlu0 %2481
    %2483 = vrot.lane.b32.xlu0 %v2464, 118
    %v2484 = vpop.permute.xlu0 %2483
    %2485 = vrot.lane.b32.xlu0 %v2465, 118
    %v2486 = vpop.permute.xlu0 %2485
    %2487 = vrot.lane.b32.xlu0 %v2466, 118
    %v2488 = vpop.permute.xlu0 %2487
    %2489 = vrot.lane.b32.xlu0 %v2467, 118
    %v2490 = vpop.permute.xlu0 %2489
    %2491 = vrot.lane.b32.xlu0 %v2468, 118
    %v2492 = vpop.permute.xlu0 %2491
    %v2501 = vsel %vm2107, %v2478, 0.0
    %2502 = vadd.xlane.f32.xlu0 %v2501
    %v2503 = vpop.xlane.xlu0 %2502
    %v2504 = vsel %vm2107, %v2480, 0.0
    %2505 = vadd.xlane.f32.xlu0 %v2504
    %v2506 = vpop.xlane.xlu0 %2505
    %v2507 = vsel %vm2107, %v2482, 0.0
    %2508 = vadd.xlane.f32.xlu0 %v2507
    %v2509 = vpop.xlane.xlu0 %2508
    %v2510 = vsel %vm2107, %v2484, 0.0
    %2511 = vadd.xlane.f32.xlu0 %v2510
    %v2512 = vpop.xlane.xlu0 %2511
    %v2513 = vsel %vm2107, %v2486, 0.0
    %2514 = vadd.xlane.f32.xlu0 %v2513
    %v2515 = vpop.xlane.xlu0 %2514
    %v2516 = vsel %vm2107, %v2488, 0.0
    %2517 = vadd.xlane.f32.xlu0 %v2516
    %v2518 = vpop.xlane.xlu0 %2517
    %v2519 = vsel %vm2107, %v2490, 0.0
    %2520 = vadd.xlane.f32.xlu0 %v2519
    %v2521 = vpop.xlane.xlu0 %2520
    %v2522 = vsel %vm2107, %v2492, 0.0
    %2523 = vadd.xlane.f32.xlu0 %v2522
    %v2524 = vpop.xlane.xlu0 %2523
    %v2525 = vrsqrt.pop %v2503
    %v2526 = vrsqrt.pop %v2506
    %v2527 = vrsqrt.pop %v2509
    %v2528 = vrsqrt.pop %v2512
    %v2529 = vrsqrt.pop %v2515
    %v2530 = vrsqrt.pop %v2518
    %v2531 = vrsqrt.pop %v2521
    %v2532 = vrsqrt.pop %v2524
    %v2533 = vmul.f32 %v2453, %v2525
    %v2534 = vmul.f32 %v2454, %v2526
    %v2535 = vmul.f32 %v2455, %v2527
    %v2536 = vmul.f32 %v2456, %v2528
    %v2537 = vmul.f32 %v2457, %v2529
    %v2538 = vmul.f32 %v2458, %v2530
    %v2539 = vmul.f32 %v2459, %v2531
    %v2540 = vmul.f32 %v2460, %v2532
    %2549 = vrot.lane.b32.xlu0 %v2533, 118
    %v2550 = vpop.permute.xlu0 %2549
    %2551 = vrot.lane.b32.xlu0 %v2534, 118
    %v2552 = vpop.permute.xlu0 %2551
    %2553 = vrot.lane.b32.xlu0 %v2535, 118
    %v2554 = vpop.permute.xlu0 %2553
    %2555 = vrot.lane.b32.xlu0 %v2536, 118
    %v2556 = vpop.permute.xlu0 %2555
    %2557 = vrot.lane.b32.xlu0 %v2537, 118
    %v2558 = vpop.permute.xlu0 %2557
    %2559 = vrot.lane.b32.xlu0 %v2538, 118
    %v2560 = vpop.permute.xlu0 %2559
    %2561 = vrot.lane.b32.xlu0 %v2539, 118
    %v2562 = vpop.permute.xlu0 %2561
    %2563 = vrot.lane.b32.xlu0 %v2540, 118
    %v2564 = vpop.permute.xlu0 %2563
    %v2566 = vsel %vm2107, %v2269, 0
    %v2569 = vsel %vm2107, %v2270, 0
    %v2572 = vsel %vm2107, %v2271, 0
    %v2575 = vsel %vm2107, %v2272, 0
    %v2578 = vsel %vm2107, %v2273, 0
    %v2581 = vsel %vm2107, %v2274, 0
    %v2584 = vsel %vm2107, %v2275, 0
    %v2587 = vsel %vm2107, %v2276, 0
    %v2589 = vsel %vm2107, %v2550, 0
    %v2591 = vsel %vm2107, %v2552, 0
    %v2593 = vsel %vm2107, %v2554, 0
    %v2595 = vsel %vm2107, %v2556, 0
    %v2597 = vsel %vm2107, %v2558, 0
    %v2599 = vsel %vm2107, %v2560, 0
    %v2601 = vsel %vm2107, %v2562, 0
    %v2603 = vsel %vm2107, %v2564, 0
    %2605 = vmatprep.subr.mxu0 0.0
    %2606 = vmatpush1.xpose.msra.mxu0 %v2589
    %2607 = vmatprep.subr.mxu0 0.0
    %2608 = vmatpush1.xpose.msra.mxu0 %v2591
    %2609 = vmatprep.subr.mxu0 0.0
    %2610 = vmatpush1.xpose.msra.mxu0 %v2593
    %2611 = vmatprep.subr.mxu0 0.0
    %2612 = vmatpush1.xpose.msra.mxu0 %v2595
    %2613 = vmatprep.subr.mxu0 0.0
    %2614 = vmatpush1.xpose.msra.mxu0 %v2597
    %2615 = vmatprep.subr.mxu0 0.0
    %2616 = vmatpush1.xpose.msra.mxu0 %v2599
    %2617 = vmatprep.subr.mxu0 0.0
    %2618 = vmatpush1.xpose.msra.mxu0 %v2601
    %2619 = vmatprep.subr.mxu0 0.0
    %2620 = vmatpush1.xpose.msra.mxu0 %v2603
    %2621 = vmatprep.subr.mxu0 0.0
    %2622 = vmatpush1.xpose.msra.mxu0 0.0
    %2623 = vmatprep.subr.mxu0 0.0
    %2624 = vmatpush1.xpose.msra.mxu0 0.0
    %2625 = vmatprep.subr.mxu0 0.0
    %2626 = vmatpush1.xpose.msra.mxu0 0.0
    %2627 = vmatprep.subr.mxu0 0.0
    %2628 = vmatpush1.xpose.msra.mxu0 0.0
    %2629 = vmatprep.subr.mxu0 0.0
    %2630 = vmatpush1.xpose.msra.mxu0 0.0
    %2631 = vmatprep.subr.mxu0 0.0
    %2632 = vmatpush1.xpose.msra.mxu0 0.0
    %2633 = vmatprep.subr.mxu0 0.0
    %2634 = vmatpush1.xpose.msra.mxu0 0.0
    %2635 = vmatprep.subr.mxu0 0.0
    %2636 = vmatpush1.xpose.msra.mxu0 0.0
    %2637 = vmatprep.subr.mxu0 0.0
    %2638 = vmatpush1.xpose.msra.mxu0 0.0
    %2639 = vmatprep.subr.mxu0 0.0
    %2640 = vmatpush1.xpose.msra.mxu0 0.0
    %2641 = vmatprep.subr.mxu0 0.0
    %2642 = vmatpush1.xpose.msra.mxu0 0.0
    %2643 = vmatprep.subr.mxu0 0.0
    %2644 = vmatpush1.xpose.msra.mxu0 0.0
    %2645 = vmatprep.subr.mxu0 0.0
    %2646 = vmatpush1.xpose.msra.mxu0 0.0
    %2647 = vmatprep.subr.mxu0 0.0
    %2648 = vmatpush1.xpose.msra.mxu0 0.0
    %2649 = vmatprep.subr.mxu0 0.0
    %2650 = vmatpush1.xpose.msra.mxu0 0.0
    %2651 = vmatprep.subr.mxu0 0.0
    %2652 = vmatpush1.xpose.msra.mxu0 0.0
    %2653 = vmatprep.subr.mxu0 0.0
    %2654 = vmatpush1.xpose.msra.mxu0 0.0
    %2655 = vmatprep.subr.mxu0 0.0
    %2656 = vmatpush1.xpose.msra.mxu0 0.0
    %2657 = vmatprep.subr.mxu0 0.0
    %2658 = vmatpush1.xpose.msra.mxu0 0.0
    %2659 = vmatprep.subr.mxu0 0.0
    %2660 = vmatpush1.xpose.msra.mxu0 0.0
    %2661 = vmatprep.subr.mxu0 0.0
    %2662 = vmatpush1.xpose.msra.mxu0 0.0
    %2663 = vmatprep.subr.mxu0 0.0
    %2664 = vmatpush1.xpose.msra.mxu0 0.0
    %2665 = vmatprep.subr.mxu0 0.0
    %2666 = vmatpush1.xpose.msra.mxu0 0.0
    %2667 = vmatprep.subr.mxu0 0.0
    %2668 = vmatpush1.xpose.msra.mxu0 0.0
    %2669 = vmatprep.mubr.f32.mxu0 0.0
    %2670 = vmatmul.mubr.f32.gmra.mrb[0].mxu0 %v2566
    %v2671 = vpop.f32.mrb[0].mxu0
    %v2672 = vadd.f32 0.0, %v2671
    %v2673 = vpop.f32.mrb[0].mxu0
    %2674 = vmatprep.mubr.f32.mxu0 0.0
    %2675 = vmatmul.mubr.f32.gmra.mrb[0].mxu0 %v2569
    %v2676 = vpop.f32.mrb[0].mxu0
    %v2677 = vadd.f32 0.0, %v2676
    %v2678 = vpop.f32.mrb[0].mxu0
    %2679 = vmatprep.mubr.f32.mxu0 0.0
    %2680 = vmatmul.mubr.f32.gmra.mrb[0].mxu0 %v2572
    %v2681 = vpop.f32.mrb[0].mxu0
    %v2682 = vadd.f32 0.0, %v2681
    %v2683 = vpop.f32.mrb[0].mxu0
    %2684 = vmatprep.mubr.f32.mxu0 0.0
    %2685 = vmatmul.mubr.f32.gmra.mrb[0].mxu0 %v2575
    %v2686 = vpop.f32.mrb[0].mxu0
    %v2687 = vadd.f32 0.0, %v2686
    %v2688 = vpop.f32.mrb[0].mxu0
    %2689 = vmatprep.mubr.f32.mxu0 0.0
    %2690 = vmatmul.mubr.f32.gmra.mrb[0].mxu0 %v2578
    %v2691 = vpop.f32.mrb[0].mxu0
    %v2692 = vadd.f32 0.0, %v2691
    %v2693 = vpop.f32.mrb[0].mxu0
    %2694 = vmatprep.mubr.f32.mxu0 0.0
    %2695 = vmatmul.mubr.f32.gmra.mrb[0].mxu0 %v2581
    %v2696 = vpop.f32.mrb[0].mxu0
    %v2697 = vadd.f32 0.0, %v2696
    %v2698 = vpop.f32.mrb[0].mxu0
    %2699 = vmatprep.mubr.f32.mxu0 0.0
    %2700 = vmatmul.mubr.f32.gmra.mrb[0].mxu0 %v2584
    %v2701 = vpop.f32.mrb[0].mxu0
    %v2702 = vadd.f32 0.0, %v2701
    %v2703 = vpop.f32.mrb[0].mxu0
    %2704 = vmatprep.mubr.f32.mxu0 0.0
    %2705 = vmatmul.mubr.f32.gmra.mrb[0].mxu0 %v2587
    %v2706 = vpop.f32.mrb[0].mxu0
    %v2707 = vadd.f32 0.0, %v2706
    %v2708 = vpop.f32.mrb[0].mxu0
    %2709 = vdwg.mxu0
    %v2710 = vmul.f32 %v2672, 2.0
    %v2711 = vmul.f32 %v2677, 2.0
    %v2712 = vmul.f32 %v2682, 2.0
    %v2713 = vmul.f32 %v2687, 2.0
    %v2714 = vmul.f32 %v2692, 2.0
    %v2715 = vmul.f32 %v2697, 2.0
    %v2716 = vmul.f32 %v2702, 2.0
    %v2717 = vmul.f32 %v2707, 2.0
    %v2726 = vmul.f32 %v2269, %v2550
    %v2727 = vmul.f32 %v2270, %v2552
    %v2728 = vmul.f32 %v2271, %v2554
    %v2729 = vmul.f32 %v2272, %v2556
    %v2730 = vmul.f32 %v2273, %v2558
    %v2731 = vmul.f32 %v2274, %v2560
    %v2732 = vmul.f32 %v2275, %v2562
    %v2733 = vmul.f32 %v2276, %v2564
    %v2734 = vsel %vm2107, %v2726, 0.0
    %2735 = vadd.xlane.f32.xlu0 %v2734
    %v2736 = vpop.xlane.xlu0 %2735
    %v2737 = vsel %vm2107, %v2727, 0.0
    %2738 = vadd.xlane.f32.xlu0 %v2737
    %v2739 = vpop.xlane.xlu0 %2738
    %v2740 = vsel %vm2107, %v2728, 0.0
    %2741 = vadd.xlane.f32.xlu0 %v2740
    %v2742 = vpop.xlane.xlu0 %2741
    %v2743 = vsel %vm2107, %v2729, 0.0
    %2744 = vadd.xlane.f32.xlu0 %v2743
    %v2745 = vpop.xlane.xlu0 %2744
    %v2746 = vsel %vm2107, %v2730, 0.0
    %2747 = vadd.xlane.f32.xlu0 %v2746
    %v2748 = vpop.xlane.xlu0 %2747
    %v2749 = vsel %vm2107, %v2731, 0.0
    %2750 = vadd.xlane.f32.xlu0 %v2749
    %v2751 = vpop.xlane.xlu0 %2750
    %v2752 = vsel %vm2107, %v2732, 0.0
    %2753 = vadd.xlane.f32.xlu0 %v2752
    %v2754 = vpop.xlane.xlu0 %2753
    %v2755 = vsel %vm2107, %v2733, 0.0
    %2756 = vadd.xlane.f32.xlu0 %v2755
    %v2757 = vpop.xlane.xlu0 %2756
    %v2758 = vmul.f32 %v2736, 2.0
    %v2759 = vmul.f32 %v2739, 2.0
    %v2760 = vmul.f32 %v2742, 2.0
    %v2761 = vmul.f32 %v2745, 2.0
    %v2762 = vmul.f32 %v2748, 2.0
    %v2763 = vmul.f32 %v2751, 2.0
    %v2764 = vmul.f32 %v2754, 2.0
    %v2765 = vmul.f32 %v2757, 2.0
    %vm2766 = vcmask 523264
    %v2767 = vsel %vm2766, %v2710, -inf
    %2768 = vmax.xlane.f32.xlu0 %v2767
    %v2769 = vpop.xlane.xlu0 %2768
    %v2770 = vsel %vm2766, %v2711, -inf
    %2771 = vmax.xlane.f32.xlu0 %v2770
    %v2772 = vpop.xlane.xlu0 %2771
    %v2773 = vsel %vm2766, %v2712, -inf
    %2774 = vmax.xlane.f32.xlu0 %v2773
    %v2775 = vpop.xlane.xlu0 %2774
    %v2776 = vsel %vm2766, %v2713, -inf
    %2777 = vmax.xlane.f32.xlu0 %v2776
    %v2778 = vpop.xlane.xlu0 %2777
    %v2779 = vsel %vm2766, %v2714, -inf
    %2780 = vmax.xlane.f32.xlu0 %v2779
    %v2781 = vpop.xlane.xlu0 %2780
    %v2782 = vsel %vm2766, %v2715, -inf
    %2783 = vmax.xlane.f32.xlu0 %v2782
    %v2784 = vpop.xlane.xlu0 %2783
    %v2785 = vsel %vm2766, %v2716, -inf
    %2786 = vmax.xlane.f32.xlu0 %v2785
    %v2787 = vpop.xlane.xlu0 %2786
    %v2788 = vsel %vm2766, %v2717, -inf
    %2789 = vmax.xlane.f32.xlu0 %v2788
    %v2790 = vpop.xlane.xlu0 %2789
    %v2791 = vsub.f32 %v2710, %v2769
    %v2792 = vsub.f32 %v2711, %v2772
    %v2793 = vsub.f32 %v2712, %v2775
    %v2794 = vsub.f32 %v2713, %v2778
    %v2795 = vsub.f32 %v2714, %v2781
    %v2796 = vsub.f32 %v2715, %v2784
    %v2797 = vsub.f32 %v2716, %v2787
    %v2798 = vsub.f32 %v2717, %v2790
    %v2799 = vmul.f32 %v2791, 1.442695
    %v2800 = vpow.pop %v2799
    %v2801 = vmul.f32 %v2792, 1.442695
    %v2802 = vpow.pop %v2801
    %v2803 = vmul.f32 %v2793, 1.442695
    %v2804 = vpow.pop %v2803
    %v2805 = vmul.f32 %v2794, 1.442695
    %v2806 = vpow.pop %v2805
    %v2807 = vmul.f32 %v2795, 1.442695
    %v2808 = vpow.pop %v2807
    %v2809 = vmul.f32 %v2796, 1.442695
    %v2810 = vpow.pop %v2809
    %v2811 = vmul.f32 %v2797, 1.442695
    %v2812 = vpow.pop %v2811
    %v2813 = vmul.f32 %v2798, 1.442695
    %v2814 = vpow.pop %v2813
    %v2815 = vsel %vm2766, %v2800, 0.0
    %2816 = vadd.xlane.f32.xlu0 %v2815
    %v2817 = vpop.xlane.xlu0 %2816
    %v2818 = vsel %vm2766, %v2802, 0.0
    %2819 = vadd.xlane.f32.xlu0 %v2818
    %v2820 = vpop.xlane.xlu0 %2819
    %v2821 = vsel %vm2766, %v2804, 0.0
    %2822 = vadd.xlane.f32.xlu0 %v2821
    %v2823 = vpop.xlane.xlu0 %2822
    %v2824 = vsel %vm2766, %v2806, 0.0
    %2825 = vadd.xlane.f32.xlu0 %v2824
    %v2826 = vpop.xlane.xlu0 %2825
    %v2827 = vsel %vm2766, %v2808, 0.0
    %2828 = vadd.xlane.f32.xlu0 %v2827
    %v2829 = vpop.xlane.xlu0 %2828
    %v2830 = vsel %vm2766, %v2810, 0.0
    %2831 = vadd.xlane.f32.xlu0 %v2830
    %v2832 = vpop.xlane.xlu0 %2831
    %v2833 = vsel %vm2766, %v2812, 0.0
    %2834 = vadd.xlane.f32.xlu0 %v2833
    %v2835 = vpop.xlane.xlu0 %2834
    %v2836 = vsel %vm2766, %v2814, 0.0
    %2837 = vadd.xlane.f32.xlu0 %v2836
    %v2838 = vpop.xlane.xlu0 %2837
    %v2839 = vlog2.pop %v2817
    %v2840 = vmul.f32 %v2839, 0.6931472
    %v2841 = vlog2.pop %v2820
    %v2842 = vmul.f32 %v2841, 0.6931472
    %v2843 = vlog2.pop %v2823
    %v2844 = vmul.f32 %v2843, 0.6931472
    %v2845 = vlog2.pop %v2826
    %v2846 = vmul.f32 %v2845, 0.6931472
    %v2847 = vlog2.pop %v2829
    %v2848 = vmul.f32 %v2847, 0.6931472
    %v2849 = vlog2.pop %v2832
    %v2850 = vmul.f32 %v2849, 0.6931472
    %v2851 = vlog2.pop %v2835
    %v2852 = vmul.f32 %v2851, 0.6931472
    %v2853 = vlog2.pop %v2838
    %v2854 = vmul.f32 %v2853, 0.6931472
    %v2855 = vadd.f32 %v2769, %v2840
    %v2856 = vadd.f32 %v2772, %v2842
    %v2857 = vadd.f32 %v2775, %v2844
    %v2858 = vadd.f32 %v2778, %v2846
    %v2859 = vadd.f32 %v2781, %v2848
    %v2860 = vadd.f32 %v2784, %v2850
    %v2861 = vadd.f32 %v2787, %v2852
    %v2862 = vadd.f32 %v2790, %v2854
    %v2863 = vmax.f32 %v2767, %v2779
    %v2864 = vmax.f32 %v2770, %v2782
    %v2865 = vmax.f32 %v2773, %v2785
    %v2866 = vmax.f32 %v2776, %v2788
    %v2867 = vmax.f32 %v2863, %v2864
    %v2868 = vmax.f32 %v2865, %v2866
    %v2869 = vmax.f32 %v2867, %v2868
    %v2870 = vrot.slane %v2869, 4
    %v2871 = vmax.f32 %v2869, %v2870
    %v2872 = vrot.slane %v2871, 2
    %v2873 = vmax.f32 %v2871, %v2872
    %v2874 = vrot.slane %v2873, 1
    %v2875 = vmax.f32 %v2873, %v2874
    %v2876 = vsub.f32 %v2710, %v2875
    %v2877 = vsub.f32 %v2711, %v2875
    %v2878 = vsub.f32 %v2712, %v2875
    %v2879 = vsub.f32 %v2713, %v2875
    %v2880 = vsub.f32 %v2714, %v2875
    %v2881 = vsub.f32 %v2715, %v2875
    %v2882 = vsub.f32 %v2716, %v2875
    %v2883 = vsub.f32 %v2717, %v2875
    %v2884 = vmul.f32 %v2876, 1.442695
    %v2885 = vpow.pop %v2884
    %v2886 = vmul.f32 %v2877, 1.442695
    %v2887 = vpow.pop %v2886
    %v2888 = vmul.f32 %v2878, 1.442695
    %v2889 = vpow.pop %v2888
    %v2890 = vmul.f32 %v2879, 1.442695
    %v2891 = vpow.pop %v2890
    %v2892 = vmul.f32 %v2880, 1.442695
    %v2893 = vpow.pop %v2892
    %v2894 = vmul.f32 %v2881, 1.442695
    %v2895 = vpow.pop %v2894
    %v2896 = vmul.f32 %v2882, 1.442695
    %v2897 = vpow.pop %v2896
    %v2898 = vmul.f32 %v2883, 1.442695
    %v2899 = vpow.pop %v2898
    %v2900 = vsel %vm2766, %v2885, 0.0
    %v2901 = vsel %vm2766, %v2887, 0.0
    %v2902 = vadd.f32 %v2900, %v2901
    %v2903 = vsel %vm2766, %v2889, 0.0
    %v2904 = vadd.f32 %v2902, %v2903
    %v2905 = vsel %vm2766, %v2891, 0.0
    %v2906 = vadd.f32 %v2904, %v2905
    %v2907 = vsel %vm2766, %v2893, 0.0
    %v2908 = vadd.f32 %v2906, %v2907
    %v2909 = vsel %vm2766, %v2895, 0.0
    %v2910 = vadd.f32 %v2908, %v2909
    %v2911 = vsel %vm2766, %v2897, 0.0
    %v2912 = vadd.f32 %v2910, %v2911
    %v2913 = vsel %vm2766, %v2899, 0.0
    %v2914 = vadd.f32 %v2912, %v2913
    %v2915 = vrot.slane %v2914, 4
    %v2916 = vadd.f32 %v2914, %v2915
    %v2917 = vrot.slane %v2916, 2
    %v2918 = vadd.f32 %v2916, %v2917
    %v2919 = vrot.slane %v2918, 1
    %v2920 = vadd.f32 %v2918, %v2919
    %v2921 = vlog2.pop %v2920
    %v2922 = vmul.f32 %v2921, 0.6931472
    %v2923 = vadd.f32 %v2875, %v2922
    %vm2924 = vcmask 7168
    %v2925 = vsel %vm2924, %v2855, 0.0
    %v2926 = vsel %vm2924, %v2856, 0.0
    %v2927 = vadd.f32 %v2925, %v2926
    %v2928 = vsel %vm2924, %v2857, 0.0
    %v2929 = vadd.f32 %v2927, %v2928
    %v2930 = vsel %vm2924, %v2858, 0.0
    %v2931 = vadd.f32 %v2929, %v2930
    %v2932 = vsel %vm2924, %v2859, 0.0
    %v2933 = vadd.f32 %v2931, %v2932
    %v2934 = vsel %vm2924, %v2860, 0.0
    %v2935 = vadd.f32 %v2933, %v2934
    %v2936 = vsel %vm2924, %v2861, 0.0
    %v2937 = vadd.f32 %v2935, %v2936
    %v2938 = vsel %vm2924, %v2862, 0.0
    %v2939 = vadd.f32 %v2937, %v2938
    %2940 = vadd.xlane.f32.xlu0 %v2939
    %v2941 = vpop.xlane.xlu0 %2940
    %v2942 = vrot.slane %v2941, 4
    %v2943 = vadd.f32 %v2941, %v2942
    %v2944 = vrot.slane %v2943, 2
    %v2945 = vadd.f32 %v2943, %v2944
    %v2946 = vrot.slane %v2945, 1
    %v2947 = vadd.f32 %v2945, %v2946
    %s2948 = vtos %v2947
    %v2949 = vrcp.pop 64.0
    %s2950 = vtos %v2949
    %s2951 = smul.f32 %s2948, %s2950
    %vm2952 = vcmask 516096
    %v2953 = vsel %vm2952, %v2923, 0.0
    %2954 = vadd.xlane.f32.xlu0 %v2953
    %v2955 = vpop.xlane.xlu0 %2954
    %v2956 = vrot.slane %v2955, 4
    %v2957 = vadd.f32 %v2955, %v2956
    %v2958 = vrot.slane %v2957, 2
    %v2959 = vadd.f32 %v2957, %v2958
    %v2960 = vrot.slane %v2959, 1
    %v2961 = vadd.f32 %v2959, %v2960
    %s2962 = vtos %v2961
    %v2963 = vrcp.pop 64.0
    %s2964 = vtos %v2963
    %s2965 = smul.f32 %s2962, %s2964
    %s2966 = sadd.f32 %s2951, %s2965
    %s2967 = smul.f32 %s2966, 0.5
    %v2968 = vsel %vm2924, %v2758, 0.0
    %v2969 = vsel %vm2924, %v2759, 0.0
    %v2970 = vadd.f32 %v2968, %v2969
    %v2971 = vsel %vm2924, %v2760, 0.0
    %v2972 = vadd.f32 %v2970, %v2971
    %v2973 = vsel %vm2924, %v2761, 0.0
    %v2974 = vadd.f32 %v2972, %v2973
    %v2975 = vsel %vm2924, %v2762, 0.0
    %v2976 = vadd.f32 %v2974, %v2975
    %v2977 = vsel %vm2924, %v2763, 0.0
    %v2978 = vadd.f32 %v2976, %v2977
    %v2979 = vsel %vm2924, %v2764, 0.0
    %v2980 = vadd.f32 %v2978, %v2979
    %v2981 = vsel %vm2924, %v2765, 0.0
    %v2982 = vadd.f32 %v2980, %v2981
    %2983 = vadd.xlane.f32.xlu0 %v2982
    %v2984 = vpop.xlane.xlu0 %2983
    %v2985 = vrot.slane %v2984, 4
    %v2986 = vadd.f32 %v2984, %v2985
    %v2987 = vrot.slane %v2986, 2
    %v2988 = vadd.f32 %v2986, %v2987
    %v2989 = vrot.slane %v2988, 1
    %v2990 = vadd.f32 %v2988, %v2989
    %s2991 = vtos %v2990
    %v2992 = vrcp.pop 64.0
    %s2993 = vtos %v2992
    %s2994 = smul.f32 %s2991, %s2993
    %s2995 = ssub.f32 %s2967, %s2994
    %s2996 = scalar_lea.smem [#allocation8], 0
    %2997 = sst [smem:[%s2996]] %s2995
    // Predicated region
    $region38: #{bimodal_forward.1} parent=1 // pred_check
      _
    $region39: #{bimodal_forward.1} parent=1 // pred_check_branch
      %2999 = sbr.rel (0) target = $region41
    $region40: #{bimodal_forward.1} parent=1 // pred_region
      %s3001 = ssub.s32 16, 16
      %3002 = vsyncadd [#allocation4], %s3001
      %3005 = dma.smem_to_hbm [#allocation8], 16, %s6, [#allocation4]
    $region41: #{bimodal_forward.1} parent=1 // pred_fallthru
      _
    // Predicated region
    $region42: #{bimodal_forward.1} parent=1 // pred_check
      _
    $region43: #{bimodal_forward.1} parent=1 // pred_check_branch
      %3007 = sbr.rel (0) target = $region45
    $region44: #{bimodal_forward.1} parent=1 // pred_region
      %3008 = dma.done [#allocation4], 16
    $region45: #{bimodal_forward.1} parent=1 // pred_fallthru
      _
    %3009 = sfence
    %3010 = vsyncpa [#allocation3], 1
    %3011 = vsyncpa [#allocation6], 1
    %3012 = vsyncpa [#allocation4], 1

</llo_original>
